<compile_context>
chip_gen: v6e
topology: v6e:2x2x1
jax: 0.10.0
libtpu: 0.0.40
codegen_flags: <defaults>
</compile_context>

<pallas_src>
import math

import jax
import jax.numpy as jnp
from jax.experimental import pallas as pl
from jax.experimental.pallas import tpu as pltpu

K = 2                         # number of GMM lobes
COND_DIM = 10                 # cond = [8 extra feats, 2 uv coords]
PE_FUNCS = 5                  # positional_encoding_1(cond[..., -2:], 5)
IN_DIM = 2 * (1 + 2 * PE_FUNCS) + (COND_DIM - 2)    # = 30
HID = 32
OUT_DIM = K * 2 * 2 + K + 1                         # = 11
PAD_OUT = 16                  # OUT_DIM rounded up to a sublane-friendly 16
N_ANG = 2 * PE_FUNCS          # 10 angle rows: [u, v] interleaved x freqs [1,2,4,8,16]
INV_TWO_PI = 1.0 / (2.0 * math.pi)


def gmm_kernel(xin_ref, fu_ref, fv_ref, wsin_ref, wcos_ref, wcond_ref,
               b1_ref, w2_ref, b2_ref, pdf_ref):
    # xin rows: 0..7 = cond[..., :-2], 8..9 = cond[..., -2:] (uv), 10..11 = wi.
    cond10 = xin_ref[0:COND_DIM, :]                     # (10, tb)
    u = xin_ref[COND_DIM - 2:COND_DIM - 1, :]           # (1, tb)
    v = xin_ref[COND_DIM - 1:COND_DIM, :]               # (1, tb)
    wi = xin_ref[COND_DIM:COND_DIM + 2, :]              # (2, tb)

    # Positional-encoding angles for all 5 frequencies as one aligned block:
    #   row 2f = 2^f * u, row 2f+1 = 2^f * v   (fu / fv are (10, 1) constant columns).
    ang = u * fu_ref[...] + v * fv_ref[...]             # (10, tb) f32
    sn = jnp.sin(ang)
    cs = jnp.cos(ang)

    # Tiny MLP, transposed, first layer split over the natural blocks so nothing is
    # staged through a VMEM scratch:  h = Wsin @ sn + Wcos @ cs + Wcond @ cond + b1.
    mxu_dt = wsin_ref.dtype                              # bf16 operands, f32 accumulation
    h = jnp.dot(wsin_ref[...], sn.astype(mxu_dt), preferred_element_type=jnp.float32)
    h = h + jnp.dot(wcos_ref[...], cs.astype(mxu_dt), preferred_element_type=jnp.float32)
    h = h + jnp.dot(wcond_ref[...], cond10.astype(mxu_dt),
                    preferred_element_type=jnp.float32)
    h = jnp.maximum(h + b1_ref[...], 0.0)                # (32, tb) f32
    ret = jnp.dot(w2_ref[...], h.astype(mxu_dt), preferred_element_type=jnp.float32)
    ret = ret + b2_ref[...]                              # (16, tb); rows 11..15 are zero
    # ret rows: 0..3 mu (lobe-major), 4..7 log_sigma, 8..10 mixture weights (pre-abs).

    inv_sig = jnp.exp(-ret[2 * K:4 * K, :])              # (4, tb) = 1/sigma
    wabs = jnp.abs(ret[4 * K:4 * K + K + 1, :])          # (3, tb)
    denom = jnp.maximum(wabs[0:1, :] + wabs[1:2, :] + wabs[2:3, :], 1e-12)
    inv_den = pl.reciprocal(denom, approx=True)          # EUP slot, effectively free

    acc = jnp.zeros_like(inv_den)                        # (1, tb)
    for k in range(K):
        mu_k = ret[2 * k:2 * k + 2, :]                   # (2, tb)
        isg_k = inv_sig[2 * k:2 * k + 2, :]              # (2, tb)
        d = (wi - mu_k) * isg_k
        d2 = d * d
        rr = d2[0:1, :] + d2[1:2, :]                     # (1, tb)
        fac = isg_k[0:1, :] * isg_k[1:2, :]              # = exp(-sum(log_sigma))
        acc = acc + wabs[k:k + 1, :] * jnp.exp(-0.5 * rr) * fac

    wi2 = wi * wi
    inside = jnp.where(wi2[0:1, :] + wi2[1:2, :] <= 1.0, 1.0, 0.0)
    # Fold 1/(2*pi) (gaussian lobes) and 1/pi = 2/(2*pi) (uniform lobe) into one scale.
    pdf = (acc + 2.0 * wabs[K:K + 1, :] * inside) * (inv_den * INV_TWO_PI)
    pdf_ref[...] = pdf                                    # lane-dense (1, tb) store


def gmm_forward(wi, cond, params, *, tb=32768, mxu_dtype=jnp.bfloat16):
    """Returns (wi, pdf) matching GMM.forward(wi, cond, inverse=False)."""
    w1, b1, w2, b2 = params
    B = cond.shape[0]

    # Lane-aligned batch tile.  Big tiles amortise the ~0.35us/step pipeline overhead;
    # cap so the grid keeps >=4 steps when the batch allows it (so the "parallel" grid
    # axis can be sharded across both v7x TensorCores).
    tb = max(128, (int(tb) // 128) * 128)
    b_ceil = -(-B // 128) * 128
    if b_ceil >= 4 * 128:
        tb = min(tb, max(128, (b_ceil // 4) // 128 * 128))
    tb = min(tb, b_ceil)
    b_pad = -(-B // tb) * tb

    # One fused pad + concat + cast + transpose copy -> a single feature-major slab.
    xin = jnp.concatenate([cond.astype(jnp.float32), wi.astype(jnp.float32)], axis=-1)
    xin = jnp.pad(xin, ((0, b_pad - B), (0, 0))).T                      # (12, b_pad)

    # (10, 1) frequency columns for the angle block (zeros select the u vs v rows).
    f10 = jnp.repeat(2.0 ** jnp.arange(PE_FUNCS, dtype=jnp.float32), 2)  # (10,)
    is_u = (jnp.arange(N_ANG) % 2 == 0)
    fu = jnp.where(is_u, f10, 0.0).reshape(N_ANG, 1)
    fv = jnp.where(is_u, 0.0, f10).reshape(N_ANG, 1)

    # Column-permuted first-layer weights matching the kernel's blocks.
    # Original feature order: [u, v, (sin_u, sin_v, cos_u, cos_v) per freq x5, rest(8)].
    w1t = w1.astype(jnp.float32).T                                       # (32, 30)
    w1_pe = w1t[:, 2:2 + 4 * PE_FUNCS].reshape(HID, PE_FUNCS, 4)
    wsin = w1_pe[:, :, 0:2].reshape(HID, N_ANG).astype(mxu_dtype)        # (32, 10)
    wcos = w1_pe[:, :, 2:4].reshape(HID, N_ANG).astype(mxu_dtype)        # (32, 10)
    wcond = jnp.concatenate([w1t[:, 22:30], w1t[:, 0:2]], axis=1).astype(mxu_dtype)
    b1c = b1.reshape(HID, 1).astype(jnp.float32)

    w2t = jnp.zeros((PAD_OUT, HID), mxu_dtype)
    w2t = w2t.at[:OUT_DIM, :].set(w2.T.astype(mxu_dtype))
    b2c = jnp.zeros((PAD_OUT, 1), jnp.float32)
    b2c = b2c.at[:OUT_DIM, 0].set(b2.reshape(OUT_DIM).astype(jnp.float32))

    grid = (b_pad // tb,)
    pdf = pl.pallas_call(
        gmm_kernel,
        out_shape=jax.ShapeDtypeStruct((1, b_pad), jnp.float32),
        grid_spec=pltpu.PrefetchScalarGridSpec(
            num_scalar_prefetch=0,
            grid=grid,
            in_specs=[
                pl.BlockSpec((COND_DIM + 2, tb), lambda i: (0, i)),   # xin   (12, tb)
                pl.BlockSpec((N_ANG, 1), lambda i: (0, 0)),           # fu    (10, 1)
                pl.BlockSpec((N_ANG, 1), lambda i: (0, 0)),           # fv    (10, 1)
                pl.BlockSpec((HID, N_ANG), lambda i: (0, 0)),         # Wsin  (32, 10)
                pl.BlockSpec((HID, N_ANG), lambda i: (0, 0)),         # Wcos  (32, 10)
                pl.BlockSpec((HID, COND_DIM), lambda i: (0, 0)),      # Wcond (32, 10)
                pl.BlockSpec((HID, 1), lambda i: (0, 0)),             # b1    (32, 1)
                pl.BlockSpec((PAD_OUT, HID), lambda i: (0, 0)),       # W2t   (16, 32)
                pl.BlockSpec((PAD_OUT, 1), lambda i: (0, 0)),         # b2    (16, 1)
            ],
            out_specs=pl.BlockSpec((1, tb), lambda i: (0, i)),        # lane-dense pdf
        ),
        # Per-step VMEM at tb=32768 stays well under the default scoped limit; pass
        # vmem_limit_bytes here only if tb is pushed past ~64K.
        compiler_params=pltpu.CompilerParams(
            dimension_semantics=("parallel",)),
    )(xin, fu, fv, wsin, wcos, wcond, b1c, w2t, b2c)

    return wi, pdf[0, :B]


def init_params(key):
    """Deterministic init mimicking torch.nn.Linear defaults (U(+/- 1/sqrt(fan_in)))."""
    k1, k2, k3, k4 = jax.random.split(key, 4)
    lim1 = 1.0 / math.sqrt(IN_DIM)
    lim2 = 1.0 / math.sqrt(HID)
    w1 = jax.random.uniform(k1, (IN_DIM, HID), jnp.float32, -lim1, lim1)
    b1 = jax.random.uniform(k2, (HID,), jnp.float32, -lim1, lim1)
    w2 = jax.random.uniform(k3, (HID, OUT_DIM), jnp.float32, -lim2, lim2)
    b2 = jax.random.uniform(k4, (OUT_DIM,), jnp.float32, -lim2, lim2)
    return w1, b1, w2, b2


def gmm_forward_ref(wi, cond, params, mxu_dtype=jnp.float32):
    """Pure-JAX reference of the PyTorch forward (inverse=False).

    `mxu_dtype=jnp.bfloat16` makes the reference mimic the kernel's bf16 matmul
    operands (accumulation stays f32) for a tight comparison.
    """
    w1, b1, w2, b2 = params
    xy = cond[..., -2:]
    parts = [xy]
    for f in (1.0, 2.0, 4.0, 8.0, 16.0):
        parts += [jnp.sin(xy * f), jnp.cos(xy * f)]
    feat = jnp.concatenate(parts + [cond[..., :-2]], -1)
    h = jnp.dot(feat.astype(mxu_dtype), w1.astype(mxu_dtype),
                preferred_element_type=jnp.float32) + b1
    h = jnp.maximum(h, 0.0)
    ret = jnp.dot(h.astype(mxu_dtype), w2.astype(mxu_dtype),
                  preferred_element_type=jnp.float32) + b2
    mu = ret[..., :2 * K].reshape(-1, K, 2)
    log_sigma = ret[..., 2 * K:4 * K].reshape(-1, K, 2)
    sigma = jnp.exp(log_sigma)
    weight = jnp.abs(ret[..., 4 * K:]).reshape(-1, K + 1)
    weight = weight / jnp.maximum(weight.sum(-1, keepdims=True), 1e-12)
    rr = (wi[:, None] - mu) / sigma
    rr = (rr * rr).sum(2)
    fac = jnp.exp(-log_sigma.sum(2)) / (2.0 * math.pi)
    pdf = (weight[..., :-1] * jnp.exp(-0.5 * rr) * fac).sum(1)
    pdf = pdf + weight[..., -1] * ((wi ** 2).sum(-1) <= 1.0).astype(jnp.float32) / math.pi
    return wi, pdf


if __name__ == "__main__":
    key = jax.random.PRNGKey(0)
    kp, kc, kw = jax.random.split(key, 3)

    B = 500   # small, deliberately not a multiple of 128 to exercise batch padding
    params = init_params(kp)
    cond = jax.random.normal(kc, (B, COND_DIM), jnp.float32)
    wi = jax.random.uniform(kw, (B, 2), jnp.float32, -1.0, 1.0)

    fwd = jax.jit(gmm_forward, static_argnames=("tb", "mxu_dtype"))
    wi_out, pdf = fwd(wi, cond, params)
    jax.block_until_ready(pdf)
    assert pdf.shape == (B,)

    # The kernel runs its matmuls with bf16 operands (f32 accumulation): compare tightly
    # against a bf16-matched reference and more loosely against the pure-f32 reference.
    _, pdf_bf16 = gmm_forward_ref(wi, cond, params, mxu_dtype=jnp.bfloat16)
    _, pdf_f32 = gmm_forward_ref(wi, cond, params, mxu_dtype=jnp.float32)
    err_bf16 = float(jnp.max(jnp.abs(pdf - pdf_bf16)))
    err_f32 = float(jnp.max(jnp.abs(pdf - pdf_f32)))
    assert jnp.allclose(pdf, pdf_bf16, rtol=1e-2, atol=1e-4), err_bf16
    assert jnp.allclose(pdf, pdf_f32, rtol=5e-2, atol=1e-3), err_f32
    assert jnp.array_equal(wi_out, wi)
    print("KERNEL_OK")
</pallas_src>

<mosaic_0001>
module attributes {stable_mosaic.version = 11 : i64} {
  func.func @gmm_kernel(%arg0: i32, %arg1: memref<12x128xf32, #tpu.memory_space<vmem>>, %arg2: memref<10x1xf32, #tpu.memory_space<vmem>>, %arg3: memref<10x1xf32, #tpu.memory_space<vmem>>, %arg4: memref<32x10xbf16, #tpu.memory_space<vmem>>, %arg5: memref<32x10xbf16, #tpu.memory_space<vmem>>, %arg6: memref<32x10xbf16, #tpu.memory_space<vmem>>, %arg7: memref<32x1xf32, #tpu.memory_space<vmem>>, %arg8: memref<16x32xbf16, #tpu.memory_space<vmem>>, %arg9: memref<16x1xf32, #tpu.memory_space<vmem>>, %arg10: memref<1x128xf32, #tpu.memory_space<vmem>>) attributes {dimension_semantics = [#tpu.dimension_semantics<parallel>], iteration_bounds = array<i64: 4>, scalar_prefetch = 0 : i64, scratch_operands = 0 : i64, tpu.core_type = #tpu.core_type<tc>, window_params = [{transform_indices = @transform_0, window_bounds = array<i64: 12, 128>}, {pipeline_mode = #tpu.pipeline_mode<synchronous>, transform_indices = @transform_1, window_bounds = array<i64: 10, 1>}, {pipeline_mode = #tpu.pipeline_mode<synchronous>, transform_indices = @transform_2, window_bounds = array<i64: 10, 1>}, {pipeline_mode = #tpu.pipeline_mode<synchronous>, transform_indices = @transform_3, window_bounds = array<i64: 32, 10>}, {pipeline_mode = #tpu.pipeline_mode<synchronous>, transform_indices = @transform_4, window_bounds = array<i64: 32, 10>}, {pipeline_mode = #tpu.pipeline_mode<synchronous>, transform_indices = @transform_5, window_bounds = array<i64: 32, 10>}, {pipeline_mode = #tpu.pipeline_mode<synchronous>, transform_indices = @transform_6, window_bounds = array<i64: 32, 1>}, {pipeline_mode = #tpu.pipeline_mode<synchronous>, transform_indices = @transform_7, window_bounds = array<i64: 16, 32>}, {pipeline_mode = #tpu.pipeline_mode<synchronous>, transform_indices = @transform_8, window_bounds = array<i64: 16, 1>}, {transform_indices = @transform_9, window_bounds = array<i64: 1, 128>}]} {
    %c0 = arith.constant 0 : index
    %c0_0 = arith.constant 0 : index
    %0 = vector.load %arg1[%c0, %c0_0] : memref<12x128xf32, #tpu.memory_space<vmem>>, vector<10x128xf32>
    %c8 = arith.constant 8 : index
    %c0_1 = arith.constant 0 : index
    %1 = vector.load %arg1[%c8, %c0_1] : memref<12x128xf32, #tpu.memory_space<vmem>>, vector<1x128xf32>
    %c9 = arith.constant 9 : index
    %c0_2 = arith.constant 0 : index
    %2 = vector.load %arg1[%c9, %c0_2] : memref<12x128xf32, #tpu.memory_space<vmem>>, vector<1x128xf32>
    %c10 = arith.constant 10 : index
    %c0_3 = arith.constant 0 : index
    %3 = vector.load %arg1[%c10, %c0_3] : memref<12x128xf32, #tpu.memory_space<vmem>>, vector<2x128xf32>
    %c0_4 = arith.constant 0 : index
    %c0_5 = arith.constant 0 : index
    %4 = vector.load %arg2[%c0_4, %c0_5] : memref<10x1xf32, #tpu.memory_space<vmem>>, vector<10x1xf32>
    %5 = vector.broadcast %1 : vector<1x128xf32> to vector<10x128xf32>
    %6 = vector.broadcast %4 : vector<10x1xf32> to vector<10x128xf32>
    %7 = arith.mulf %5, %6 : vector<10x128xf32>
    %c0_6 = arith.constant 0 : index
    %c0_7 = arith.constant 0 : index
    %8 = vector.load %arg3[%c0_6, %c0_7] : memref<10x1xf32, #tpu.memory_space<vmem>>, vector<10x1xf32>
    %9 = vector.broadcast %2 : vector<1x128xf32> to vector<10x128xf32>
    %10 = vector.broadcast %8 : vector<10x1xf32> to vector<10x128xf32>
    %11 = arith.mulf %9, %10 : vector<10x128xf32>
    %12 = arith.addf %7, %11 : vector<10x128xf32>
    %13 = math.sin %12 : vector<10x128xf32>
    %14 = math.cos %12 : vector<10x128xf32>
    %c0_8 = arith.constant 0 : index
    %c0_9 = arith.constant 0 : index
    %15 = vector.load %arg4[%c0_8, %c0_9] : memref<32x10xbf16, #tpu.memory_space<vmem>>, vector<32x10xbf16>
    %16 = arith.truncf %13 : vector<10x128xf32> to vector<10x128xbf16>
    %cst = arith.constant dense<0.000000e+00> : vector<32x128xf32>
    %17 = tpu.matmul %15, %16, %cst {dimension_numbers = #tpu.dot_dimension_numbers<[1], [0], [0], [1], [0, 0, 1, 1], [], []>} : vector<32x10xbf16>, vector<10x128xbf16>, vector<32x128xf32> -> vector<32x128xf32>
    %c0_10 = arith.constant 0 : index
    %c0_11 = arith.constant 0 : index
    %18 = vector.load %arg5[%c0_10, %c0_11] : memref<32x10xbf16, #tpu.memory_space<vmem>>, vector<32x10xbf16>
    %19 = arith.truncf %14 : vector<10x128xf32> to vector<10x128xbf16>
    %cst_12 = arith.constant dense<0.000000e+00> : vector<32x128xf32>
    %20 = tpu.matmul %18, %19, %cst_12 {dimension_numbers = #tpu.dot_dimension_numbers<[1], [0], [0], [1], [0, 0, 1, 1], [], []>} : vector<32x10xbf16>, vector<10x128xbf16>, vector<32x128xf32> -> vector<32x128xf32>
    %21 = arith.addf %17, %20 : vector<32x128xf32>
    %c0_13 = arith.constant 0 : index
    %c0_14 = arith.constant 0 : index
    %22 = vector.load %arg6[%c0_13, %c0_14] : memref<32x10xbf16, #tpu.memory_space<vmem>>, vector<32x10xbf16>
    %23 = arith.truncf %0 : vector<10x128xf32> to vector<10x128xbf16>
    %cst_15 = arith.constant dense<0.000000e+00> : vector<32x128xf32>
    %24 = tpu.matmul %22, %23, %cst_15 {dimension_numbers = #tpu.dot_dimension_numbers<[1], [0], [0], [1], [0, 0, 1, 1], [], []>} : vector<32x10xbf16>, vector<10x128xbf16>, vector<32x128xf32> -> vector<32x128xf32>
    %25 = arith.addf %21, %24 : vector<32x128xf32>
    %c0_16 = arith.constant 0 : index
    %c0_17 = arith.constant 0 : index
    %26 = vector.load %arg7[%c0_16, %c0_17] : memref<32x1xf32, #tpu.memory_space<vmem>>, vector<32x1xf32>
    %27 = vector.broadcast %26 : vector<32x1xf32> to vector<32x128xf32>
    %28 = arith.addf %25, %27 : vector<32x128xf32>
    %cst_18 = arith.constant 0.000000e+00 : f32
    %29 = vector.broadcast %cst_18 : f32 to vector<32x128xf32>
    %30 = arith.maximumf %28, %29 : vector<32x128xf32>
    %c0_19 = arith.constant 0 : index
    %c0_20 = arith.constant 0 : index
    %31 = vector.load %arg8[%c0_19, %c0_20] : memref<16x32xbf16, #tpu.memory_space<vmem>>, vector<16x32xbf16>
    %32 = arith.truncf %30 : vector<32x128xf32> to vector<32x128xbf16>
    %cst_21 = arith.constant dense<0.000000e+00> : vector<16x128xf32>
    %33 = tpu.matmul %31, %32, %cst_21 {dimension_numbers = #tpu.dot_dimension_numbers<[1], [0], [0], [1], [0, 0, 1, 1], [], []>} : vector<16x32xbf16>, vector<32x128xbf16>, vector<16x128xf32> -> vector<16x128xf32>
    %c0_22 = arith.constant 0 : index
    %c0_23 = arith.constant 0 : index
    %34 = vector.load %arg9[%c0_22, %c0_23] : memref<16x1xf32, #tpu.memory_space<vmem>>, vector<16x1xf32>
    %35 = vector.broadcast %34 : vector<16x1xf32> to vector<16x128xf32>
    %36 = arith.addf %33, %35 : vector<16x128xf32>
    %37 = vector.extract_strided_slice %36 {offsets = [4, 0], sizes = [4, 128], strides = [1, 1]} : vector<16x128xf32> to vector<4x128xf32>
    %cst_24 = arith.constant 0.000000e+00 : f32
    %38 = vector.broadcast %cst_24 : f32 to vector<4x128xf32>
    %39 = arith.subf %38, %37 : vector<4x128xf32>
    %40 = math.exp %39 : vector<4x128xf32>
    %41 = vector.extract_strided_slice %36 {offsets = [8, 0], sizes = [3, 128], strides = [1, 1]} : vector<16x128xf32> to vector<3x128xf32>
    %42 = math.absf %41 : vector<3x128xf32>
    %43 = vector.extract_strided_slice %42 {offsets = [0, 0], sizes = [1, 128], strides = [1, 1]} : vector<3x128xf32> to vector<1x128xf32>
    %44 = vector.extract_strided_slice %42 {offsets = [1, 0], sizes = [1, 128], strides = [1, 1]} : vector<3x128xf32> to vector<1x128xf32>
    %45 = arith.addf %43, %44 : vector<1x128xf32>
    %46 = vector.extract_strided_slice %42 {offsets = [2, 0], sizes = [1, 128], strides = [1, 1]} : vector<3x128xf32> to vector<1x128xf32>
    %47 = arith.addf %45, %46 : vector<1x128xf32>
    %cst_25 = arith.constant 9.99999996E-13 : f32
    %48 = vector.broadcast %cst_25 : f32 to vector<1x128xf32>
    %49 = arith.maximumf %47, %48 : vector<1x128xf32>
    %50 = tpu.reciprocal %49 {approx = true} : vector<1x128xf32> -> vector<1x128xf32>
    %cst_26 = arith.constant 0.000000e+00 : f32
    %51 = vector.broadcast %cst_26 : f32 to vector<1x128xf32>
    %52 = vector.extract_strided_slice %36 {offsets = [0, 0], sizes = [2, 128], strides = [1, 1]} : vector<16x128xf32> to vector<2x128xf32>
    %53 = vector.extract_strided_slice %40 {offsets = [0, 0], sizes = [2, 128], strides = [1, 1]} : vector<4x128xf32> to vector<2x128xf32>
    %54 = arith.subf %3, %52 : vector<2x128xf32>
    %55 = arith.mulf %54, %53 : vector<2x128xf32>
    %56 = arith.mulf %55, %55 : vector<2x128xf32>
    %57 = vector.extract_strided_slice %56 {offsets = [0, 0], sizes = [1, 128], strides = [1, 1]} : vector<2x128xf32> to vector<1x128xf32>
    %58 = vector.extract_strided_slice %56 {offsets = [1, 0], sizes = [1, 128], strides = [1, 1]} : vector<2x128xf32> to vector<1x128xf32>
    %59 = arith.addf %57, %58 : vector<1x128xf32>
    %60 = vector.extract_strided_slice %53 {offsets = [0, 0], sizes = [1, 128], strides = [1, 1]} : vector<2x128xf32> to vector<1x128xf32>
    %61 = vector.extract_strided_slice %53 {offsets = [1, 0], sizes = [1, 128], strides = [1, 1]} : vector<2x128xf32> to vector<1x128xf32>
    %62 = arith.mulf %60, %61 : vector<1x128xf32>
    %63 = vector.extract_strided_slice %42 {offsets = [0, 0], sizes = [1, 128], strides = [1, 1]} : vector<3x128xf32> to vector<1x128xf32>
    %cst_27 = arith.constant -5.000000e-01 : f32
    %64 = vector.broadcast %cst_27 : f32 to vector<1x128xf32>
    %65 = arith.mulf %64, %59 : vector<1x128xf32>
    %66 = math.exp %65 : vector<1x128xf32>
    %67 = arith.mulf %63, %66 : vector<1x128xf32>
    %68 = arith.mulf %67, %62 : vector<1x128xf32>
    %69 = arith.addf %51, %68 : vector<1x128xf32>
    %70 = vector.extract_strided_slice %36 {offsets = [2, 0], sizes = [2, 128], strides = [1, 1]} : vector<16x128xf32> to vector<2x128xf32>
    %71 = vector.extract_strided_slice %40 {offsets = [2, 0], sizes = [2, 128], strides = [1, 1]} : vector<4x128xf32> to vector<2x128xf32>
    %72 = arith.subf %3, %70 : vector<2x128xf32>
    %73 = arith.mulf %72, %71 : vector<2x128xf32>
    %74 = arith.mulf %73, %73 : vector<2x128xf32>
    %75 = vector.extract_strided_slice %74 {offsets = [0, 0], sizes = [1, 128], strides = [1, 1]} : vector<2x128xf32> to vector<1x128xf32>
    %76 = vector.extract_strided_slice %74 {offsets = [1, 0], sizes = [1, 128], strides = [1, 1]} : vector<2x128xf32> to vector<1x128xf32>
    %77 = arith.addf %75, %76 : vector<1x128xf32>
    %78 = vector.extract_strided_slice %71 {offsets = [0, 0], sizes = [1, 128], strides = [1, 1]} : vector<2x128xf32> to vector<1x128xf32>
    %79 = vector.extract_strided_slice %71 {offsets = [1, 0], sizes = [1, 128], strides = [1, 1]} : vector<2x128xf32> to vector<1x128xf32>
    %80 = arith.mulf %78, %79 : vector<1x128xf32>
    %81 = vector.extract_strided_slice %42 {offsets = [1, 0], sizes = [1, 128], strides = [1, 1]} : vector<3x128xf32> to vector<1x128xf32>
    %cst_28 = arith.constant -5.000000e-01 : f32
    %82 = vector.broadcast %cst_28 : f32 to vector<1x128xf32>
    %83 = arith.mulf %82, %77 : vector<1x128xf32>
    %84 = math.exp %83 : vector<1x128xf32>
    %85 = arith.mulf %81, %84 : vector<1x128xf32>
    %86 = arith.mulf %85, %80 : vector<1x128xf32>
    %87 = arith.addf %69, %86 : vector<1x128xf32>
    %88 = arith.mulf %3, %3 : vector<2x128xf32>
    %89 = vector.extract_strided_slice %88 {offsets = [0, 0], sizes = [1, 128], strides = [1, 1]} : vector<2x128xf32> to vector<1x128xf32>
    %90 = vector.extract_strided_slice %88 {offsets = [1, 0], sizes = [1, 128], strides = [1, 1]} : vector<2x128xf32> to vector<1x128xf32>
    %91 = arith.addf %89, %90 : vector<1x128xf32>
    %cst_29 = arith.constant 1.000000e+00 : f32
    %92 = vector.broadcast %cst_29 : f32 to vector<1x128xf32>
    %93 = arith.cmpf ole, %91, %92 : vector<1x128xf32>
    %cst_30 = arith.constant 1.000000e+00 : f32
    %cst_31 = arith.constant 0.000000e+00 : f32
    %94 = vector.broadcast %cst_30 : f32 to vector<1x128xf32>
    %95 = vector.broadcast %cst_31 : f32 to vector<1x128xf32>
    %96 = arith.select %93, %94, %95 : vector<1x128xi1>, vector<1x128xf32>
    %97 = vector.extract_strided_slice %42 {offsets = [2, 0], sizes = [1, 128], strides = [1, 1]} : vector<3x128xf32> to vector<1x128xf32>
    %cst_32 = arith.constant 2.000000e+00 : f32
    %98 = vector.broadcast %cst_32 : f32 to vector<1x128xf32>
    %99 = arith.mulf %98, %97 : vector<1x128xf32>
    %100 = arith.mulf %99, %96 : vector<1x128xf32>
    %101 = arith.addf %87, %100 : vector<1x128xf32>
    %cst_33 = arith.constant 0.159154937 : f32
    %102 = vector.broadcast %cst_33 : f32 to vector<1x128xf32>
    %103 = arith.mulf %50, %102 : vector<1x128xf32>
    %104 = arith.mulf %101, %103 : vector<1x128xf32>
    %c0_34 = arith.constant 0 : index
    %c0_35 = arith.constant 0 : index
    %105 = vector.load %arg10[%c0_34, %c0_35] : memref<1x128xf32, #tpu.memory_space<vmem>>, vector<1x128xf32>
    tpu.vector_store %arg10[%c0_34, %c0_35], %104 {strides = array<i32>} : memref<1x128xf32, #tpu.memory_space<vmem>>, vector<1x128xf32>,
    return
  }
  func.func @transform_0(%arg0: i32) -> (i32, i32) {
    %c0_i32 = arith.constant 0 : i32
    %c0_i32_0 = arith.constant 0 : i32
    return %c0_i32, %arg0 : i32, i32
  }
  func.func @transform_1(%arg0: i32) -> (i32, i32) {
    %c0_i32 = arith.constant 0 : i32
    %c0_i32_0 = arith.constant 0 : i32
    %c0_i32_1 = arith.constant 0 : i32
    return %c0_i32, %c0_i32_0 : i32, i32
  }
  func.func @transform_2(%arg0: i32) -> (i32, i32) {
    %c0_i32 = arith.constant 0 : i32
    %c0_i32_0 = arith.constant 0 : i32
    %c0_i32_1 = arith.constant 0 : i32
    return %c0_i32, %c0_i32_0 : i32, i32
  }
  func.func @transform_3(%arg0: i32) -> (i32, i32) {
    %c0_i32 = arith.constant 0 : i32
    %c0_i32_0 = arith.constant 0 : i32
    %c0_i32_1 = arith.constant 0 : i32
    return %c0_i32, %c0_i32_0 : i32, i32
  }
  func.func @transform_4(%arg0: i32) -> (i32, i32) {
    %c0_i32 = arith.constant 0 : i32
    %c0_i32_0 = arith.constant 0 : i32
    %c0_i32_1 = arith.constant 0 : i32
    return %c0_i32, %c0_i32_0 : i32, i32
  }
  func.func @transform_5(%arg0: i32) -> (i32, i32) {
    %c0_i32 = arith.constant 0 : i32
    %c0_i32_0 = arith.constant 0 : i32
    %c0_i32_1 = arith.constant 0 : i32
    return %c0_i32, %c0_i32_0 : i32, i32
  }
  func.func @transform_6(%arg0: i32) -> (i32, i32) {
    %c0_i32 = arith.constant 0 : i32
    %c0_i32_0 = arith.constant 0 : i32
    %c0_i32_1 = arith.constant 0 : i32
    return %c0_i32, %c0_i32_0 : i32, i32
  }
  func.func @transform_7(%arg0: i32) -> (i32, i32) {
    %c0_i32 = arith.constant 0 : i32
    %c0_i32_0 = arith.constant 0 : i32
    %c0_i32_1 = arith.constant 0 : i32
    return %c0_i32, %c0_i32_0 : i32, i32
  }
  func.func @transform_8(%arg0: i32) -> (i32, i32) {
    %c0_i32 = arith.constant 0 : i32
    %c0_i32_0 = arith.constant 0 : i32
    %c0_i32_1 = arith.constant 0 : i32
    return %c0_i32, %c0_i32_0 : i32, i32
  }
  func.func @transform_9(%arg0: i32) -> (i32, i32) {
    %c0_i32 = arith.constant 0 : i32
    %c0_i32_0 = arith.constant 0 : i32
    return %c0_i32, %arg0 : i32, i32
  }
}

</mosaic_0001>

<llo_original>
// kernel: gmm_forward.1
$region0: #{gmm_forward.1}
  #allocation0 [shape = 'u32[]', space=smem, size = 0x4, offset = 0x4, fixed_abs, tag = 'smem constant byte address 0x4 - core index']
  #allocation1 [shape = 'u32[144,128]{1,0:T(1,128)}', space=vmem, size = 0x12000, scoped, tag = 'internal scratch']
  %s0 = inlined_call_operand.vmem [shape: f32[12,512], index: 0, kind: input, shape index: {}]
  %s1 = inlined_call_operand.vmem [shape: f32[10,1], index: 1, kind: input, shape index: {}]
  %s2 = inlined_call_operand.vmem [shape: f32[10,1], index: 2, kind: input, shape index: {}]
  %s3 = inlined_call_operand.vmem [shape: bf16[32,10], index: 3, kind: input, shape index: {}]
  %s4 = inlined_call_operand.vmem [shape: bf16[32,10], index: 4, kind: input, shape index: {}]
  %s5 = inlined_call_operand.vmem [shape: bf16[32,10], index: 5, kind: input, shape index: {}]
  %s6 = inlined_call_operand.vmem [shape: f32[32,1], index: 6, kind: input, shape index: {}]
  %s7 = inlined_call_operand.vmem [shape: bf16[16,32], index: 7, kind: input, shape index: {}]
  %s8 = inlined_call_operand.vmem [shape: f32[16,1], index: 8, kind: input, shape index: {}]
  %s9 = inlined_call_operand.hbm [shape: f32[1,512], index: 9, kind: output, shape index: {}]
  %s10 = sld [smem:[#allocation0]]
  $region107: #{gmm_forward.1} parent=0
    _
  %s12 = ssub.s32 1, %s10
  %s13 = scalar_select 0, %s12, %s10
  $region1: #{gmm_forward.1} parent=0
    #allocation2 [shape = 'u8[16384]{0}', space=vmem, size = 0x4000, scoped, tag = 'input window, operand 0']
    #allocation3 [shape = 'u8[1024]{0}', space=vmem, size = 0x400, scoped, tag = 'output window, operand 0']
    #allocation4 [shape = 's32[2]{0}', space=sflag, size = 0x8, scoped, tag = 'scoped memory for gmm_forward.1']
    %14 = vsyncpa [#allocation4], 0
    %s15 = scalar_lea.sflag [#allocation4], 1
    %16 = vsyncpa %s15, 0
    loop: start=0, step=1, limit=6
    $region2: #{gmm_forward.1} parent=1 // loop_pre_header
      _
    $region3: #{gmm_forward.1} parent=1 // loop_header
      %s18 = sphi 0, %s22
      %p19 = scmp.ge.s32.totalorder %s18, 6
      %s28 = sphi 0, %s30
      %s31 = sphi 0, %s28
      %s32 = sphi 0, %s31
      %s48 = sphi 0, %s32
      %s52 = sphi 0, %s52
      %s54 = sphi 0, %s52
      %s55 = sphi 0, %s54
      %s69 = sphi 0, %s55
      %s73 = sphi 0, %s73
      %s75 = sphi 0, %s73
      %s76 = sphi 0, %s75
      %s90 = sphi 0, %s76
      %s94 = sphi 0, %s94
      %s96 = sphi 0, %s94
      %s97 = sphi 0, %s96
      %s111 = sphi 0, %s97
      %s115 = sphi 0, %s115
      %s117 = sphi 0, %s115
      %s118 = sphi 0, %s117
      %s132 = sphi 0, %s118
      %s136 = sphi 0, %s136
      %s138 = sphi 0, %s136
      %s139 = sphi 0, %s138
      %s153 = sphi 0, %s139
      %s157 = sphi 0, %s157
      %s159 = sphi 0, %s157
      %s160 = sphi 0, %s159
      %s174 = sphi 0, %s160
      %s178 = sphi 0, %s178
      %s180 = sphi 0, %s178
      %s181 = sphi 0, %s180
      %s195 = sphi 0, %s181
      %s199 = sphi 0, %s199
      %s201 = sphi 0, %s199
      %s202 = sphi 0, %s201
      %s216 = sphi 0, %s202
      %s222 = sphi 0, %s224
      %s225 = sphi 0, %s222
      %s226 = sphi 0, %s225
      %s242 = sphi 0, %s226
    $region4: #{gmm_forward.1} parent=1 // loop_header_branch
      %21 = sbr.rel (%p19) target = $region8
    $region5: #{gmm_forward.1} parent=1 // loop_body
      %s23 = ssub.s32 %s18, 1
      %s24 = ssub.s32 %s18, 2
      %s25 = sadd.s32 %s18, 1
      %s26 = ssub.s32 %s18, %s25
      %p27 = scmp.eq.s32.totalorder %s26, 0
      %s29 = sadd.s32 %s28, 1
      %s30 = scalar_select %p27, %s28, %s29
      %p33 = pneg %p27
      %p34 = scmp.eq.s32.totalorder %s18, 3
      %p35 = por %p33, %p34
      %p36 = scmp.ne.s32.totalorder %s28, %s31
      %p37 = scmp.eq.s32.totalorder %s18, 0
      %p38 = por %p36, %p37
      %p39 = scmp.ne.s32.totalorder %s28, %s31
      %p40 = scmp.eq.s32.totalorder %s23, 3
      %p41 = por %p39, %p40
      %p42 = scmp.ne.s32.totalorder %s31, %s32
      %p43 = scmp.eq.s32.totalorder %s23, 0
      %p44 = por %p42, %p43
      %p45 = scmp.ne.s32.totalorder %s31, %s32
      %p46 = scmp.eq.s32.totalorder %s24, 3
      %p47 = por %p45, %p46
      %p49 = scmp.ne.s32.totalorder %s32, %s48
      %p50 = scmp.eq.s32.totalorder %s24, 0
      %p51 = por %p49, %p50
      %s53 = sadd.s32 %s52, 1
      %p56 = scmp.eq.s32.totalorder %s18, 3
      %p57 = scmp.ne.s32.totalorder %s52, %s54
      %p58 = scmp.eq.s32.totalorder %s18, 0
      %p59 = por %p57, %p58
      %p60 = scmp.ne.s32.totalorder %s52, %s54
      %p61 = scmp.eq.s32.totalorder %s23, 3
      %p62 = por %p60, %p61
      %p63 = scmp.ne.s32.totalorder %s54, %s55
      %p64 = scmp.eq.s32.totalorder %s23, 0
      %p65 = por %p63, %p64
      %p66 = scmp.ne.s32.totalorder %s54, %s55
      %p67 = scmp.eq.s32.totalorder %s24, 3
      %p68 = por %p66, %p67
      %p70 = scmp.ne.s32.totalorder %s55, %s69
      %p71 = scmp.eq.s32.totalorder %s24, 0
      %p72 = por %p70, %p71
      %s74 = sadd.s32 %s73, 1
      %p77 = scmp.eq.s32.totalorder %s18, 3
      %p78 = scmp.ne.s32.totalorder %s73, %s75
      %p79 = scmp.eq.s32.totalorder %s18, 0
      %p80 = por %p78, %p79
      %p81 = scmp.ne.s32.totalorder %s73, %s75
      %p82 = scmp.eq.s32.totalorder %s23, 3
      %p83 = por %p81, %p82
      %p84 = scmp.ne.s32.totalorder %s75, %s76
      %p85 = scmp.eq.s32.totalorder %s23, 0
      %p86 = por %p84, %p85
      %p87 = scmp.ne.s32.totalorder %s75, %s76
      %p88 = scmp.eq.s32.totalorder %s24, 3
      %p89 = por %p87, %p88
      %p91 = scmp.ne.s32.totalorder %s76, %s90
      %p92 = scmp.eq.s32.totalorder %s24, 0
      %p93 = por %p91, %p92
      %s95 = sadd.s32 %s94, 1
      %p98 = scmp.eq.s32.totalorder %s18, 3
      %p99 = scmp.ne.s32.totalorder %s94, %s96
      %p100 = scmp.eq.s32.totalorder %s18, 0
      %p101 = por %p99, %p100
      %p102 = scmp.ne.s32.totalorder %s94, %s96
      %p103 = scmp.eq.s32.totalorder %s23, 3
      %p104 = por %p102, %p103
      %p105 = scmp.ne.s32.totalorder %s96, %s97
      %p106 = scmp.eq.s32.totalorder %s23, 0
      %p107 = por %p105, %p106
      %p108 = scmp.ne.s32.totalorder %s96, %s97
      %p109 = scmp.eq.s32.totalorder %s24, 3
      %p110 = por %p108, %p109
      %p112 = scmp.ne.s32.totalorder %s97, %s111
      %p113 = scmp.eq.s32.totalorder %s24, 0
      %p114 = por %p112, %p113
      %s116 = sadd.s32 %s115, 1
      %p119 = scmp.eq.s32.totalorder %s18, 3
      %p120 = scmp.ne.s32.totalorder %s115, %s117
      %p121 = scmp.eq.s32.totalorder %s18, 0
      %p122 = por %p120, %p121
      %p123 = scmp.ne.s32.totalorder %s115, %s117
      %p124 = scmp.eq.s32.totalorder %s23, 3
      %p125 = por %p123, %p124
      %p126 = scmp.ne.s32.totalorder %s117, %s118
      %p127 = scmp.eq.s32.totalorder %s23, 0
      %p128 = por %p126, %p127
      %p129 = scmp.ne.s32.totalorder %s117, %s118
      %p130 = scmp.eq.s32.totalorder %s24, 3
      %p131 = por %p129, %p130
      %p133 = scmp.ne.s32.totalorder %s118, %s132
      %p134 = scmp.eq.s32.totalorder %s24, 0
      %p135 = por %p133, %p134
      %s137 = sadd.s32 %s136, 1
      %p140 = scmp.eq.s32.totalorder %s18, 3
      %p141 = scmp.ne.s32.totalorder %s136, %s138
      %p142 = scmp.eq.s32.totalorder %s18, 0
      %p143 = por %p141, %p142
      %p144 = scmp.ne.s32.totalorder %s136, %s138
      %p145 = scmp.eq.s32.totalorder %s23, 3
      %p146 = por %p144, %p145
      %p147 = scmp.ne.s32.totalorder %s138, %s139
      %p148 = scmp.eq.s32.totalorder %s23, 0
      %p149 = por %p147, %p148
      %p150 = scmp.ne.s32.totalorder %s138, %s139
      %p151 = scmp.eq.s32.totalorder %s24, 3
      %p152 = por %p150, %p151
      %p154 = scmp.ne.s32.totalorder %s139, %s153
      %p155 = scmp.eq.s32.totalorder %s24, 0
      %p156 = por %p154, %p155
      %s158 = sadd.s32 %s157, 1
      %p161 = scmp.eq.s32.totalorder %s18, 3
      %p162 = scmp.ne.s32.totalorder %s157, %s159
      %p163 = scmp.eq.s32.totalorder %s18, 0
      %p164 = por %p162, %p163
      %p165 = scmp.ne.s32.totalorder %s157, %s159
      %p166 = scmp.eq.s32.totalorder %s23, 3
      %p167 = por %p165, %p166
      %p168 = scmp.ne.s32.totalorder %s159, %s160
      %p169 = scmp.eq.s32.totalorder %s23, 0
      %p170 = por %p168, %p169
      %p171 = scmp.ne.s32.totalorder %s159, %s160
      %p172 = scmp.eq.s32.totalorder %s24, 3
      %p173 = por %p171, %p172
      %p175 = scmp.ne.s32.totalorder %s160, %s174
      %p176 = scmp.eq.s32.totalorder %s24, 0
      %p177 = por %p175, %p176
      %s179 = sadd.s32 %s178, 1
      %p182 = scmp.eq.s32.totalorder %s18, 3
      %p183 = scmp.ne.s32.totalorder %s178, %s180
      %p184 = scmp.eq.s32.totalorder %s18, 0
      %p185 = por %p183, %p184
      %p186 = scmp.ne.s32.totalorder %s178, %s180
      %p187 = scmp.eq.s32.totalorder %s23, 3
      %p188 = por %p186, %p187
      %p189 = scmp.ne.s32.totalorder %s180, %s181
      %p190 = scmp.eq.s32.totalorder %s23, 0
      %p191 = por %p189, %p190
      %p192 = scmp.ne.s32.totalorder %s180, %s181
      %p193 = scmp.eq.s32.totalorder %s24, 3
      %p194 = por %p192, %p193
      %p196 = scmp.ne.s32.totalorder %s181, %s195
      %p197 = scmp.eq.s32.totalorder %s24, 0
      %p198 = por %p196, %p197
      %s200 = sadd.s32 %s199, 1
      %p203 = scmp.eq.s32.totalorder %s18, 3
      %p204 = scmp.ne.s32.totalorder %s199, %s201
      %p205 = scmp.eq.s32.totalorder %s18, 0
      %p206 = por %p204, %p205
      %p207 = scmp.ne.s32.totalorder %s199, %s201
      %p208 = scmp.eq.s32.totalorder %s23, 3
      %p209 = por %p207, %p208
      %p210 = scmp.ne.s32.totalorder %s201, %s202
      %p211 = scmp.eq.s32.totalorder %s23, 0
      %p212 = por %p210, %p211
      %p213 = scmp.ne.s32.totalorder %s201, %s202
      %p214 = scmp.eq.s32.totalorder %s24, 3
      %p215 = por %p213, %p214
      %p217 = scmp.ne.s32.totalorder %s202, %s216
      %p218 = scmp.eq.s32.totalorder %s24, 0
      %p219 = por %p217, %p218
      %s220 = ssub.s32 %s18, %s25
      %p221 = scmp.eq.s32.totalorder %s220, 0
      %s223 = sadd.s32 %s222, 1
      %s224 = scalar_select %p221, %s222, %s223
      %p227 = pneg %p221
      %p228 = scmp.eq.s32.totalorder %s18, 3
      %p229 = por %p227, %p228
      %p230 = scmp.ne.s32.totalorder %s222, %s225
      %p231 = scmp.eq.s32.totalorder %s18, 0
      %p232 = por %p230, %p231
      %p233 = scmp.ne.s32.totalorder %s222, %s225
      %p234 = scmp.eq.s32.totalorder %s23, 3
      %p235 = por %p233, %p234
      %p236 = scmp.ne.s32.totalorder %s225, %s226
      %p237 = scmp.eq.s32.totalorder %s23, 0
      %p238 = por %p236, %p237
      %p239 = scmp.ne.s32.totalorder %s225, %s226
      %p240 = scmp.eq.s32.totalorder %s24, 3
      %p241 = por %p239, %p240
      %p243 = scmp.ne.s32.totalorder %s226, %s242
      %p244 = scmp.eq.s32.totalorder %s24, 0
      %p245 = por %p243, %p244
      %p246 = scmp.le.s32.totalorder 1, %s18
      %p247 = scmp.lt.s32.totalorder %s18, 5
      %p248 = pnand %p246, %p247
      %p249 = pneg %p248
      // Predicated region
      $region9: #{gmm_forward.1} parent=5 // pred_check
        _
      $region10: #{gmm_forward.1} parent=5 // pred_check_branch
        %251 = sbr.rel (%p248) target = $region12
      $region11: #{gmm_forward.1} parent=5 // pred_region
        %s252 = ssub.s32 %s18, 1
        // Predicated region
        $region13: #{gmm_forward.1} parent=11 // pred_check
          %p253 = pneg %p65
        $region14: #{gmm_forward.1} parent=11 // pred_check_branch
          %255 = sbr.rel (%p253) target = $region16
        $region15: #{gmm_forward.1} parent=11 // pred_region
          _
        $region16: #{gmm_forward.1} parent=11 // pred_fallthru
          _
        // Predicated region
        $region17: #{gmm_forward.1} parent=11 // pred_check
          %p256 = pneg %p86
        $region18: #{gmm_forward.1} parent=11 // pred_check_branch
          %258 = sbr.rel (%p256) target = $region20
        $region19: #{gmm_forward.1} parent=11 // pred_region
          _
        $region20: #{gmm_forward.1} parent=11 // pred_fallthru
          _
        // Predicated region
        $region21: #{gmm_forward.1} parent=11 // pred_check
          %p259 = pneg %p107
        $region22: #{gmm_forward.1} parent=11 // pred_check_branch
          %261 = sbr.rel (%p259) target = $region24
        $region23: #{gmm_forward.1} parent=11 // pred_region
          _
        $region24: #{gmm_forward.1} parent=11 // pred_fallthru
          _
        // Predicated region
        $region25: #{gmm_forward.1} parent=11 // pred_check
          %p262 = pneg %p128
        $region26: #{gmm_forward.1} parent=11 // pred_check_branch
          %264 = sbr.rel (%p262) target = $region28
        $region27: #{gmm_forward.1} parent=11 // pred_region
          _
        $region28: #{gmm_forward.1} parent=11 // pred_fallthru
          _
        // Predicated region
        $region29: #{gmm_forward.1} parent=11 // pred_check
          %p265 = pneg %p149
        $region30: #{gmm_forward.1} parent=11 // pred_check_branch
          %267 = sbr.rel (%p265) target = $region32
        $region31: #{gmm_forward.1} parent=11 // pred_region
          _
        $region32: #{gmm_forward.1} parent=11 // pred_fallthru
          _
        // Predicated region
        $region33: #{gmm_forward.1} parent=11 // pred_check
          %p268 = pneg %p170
        $region34: #{gmm_forward.1} parent=11 // pred_check_branch
          %270 = sbr.rel (%p268) target = $region36
        $region35: #{gmm_forward.1} parent=11 // pred_region
          _
        $region36: #{gmm_forward.1} parent=11 // pred_fallthru
          _
        // Predicated region
        $region37: #{gmm_forward.1} parent=11 // pred_check
          %p271 = pneg %p191
        $region38: #{gmm_forward.1} parent=11 // pred_check_branch
          %273 = sbr.rel (%p271) target = $region40
        $region39: #{gmm_forward.1} parent=11 // pred_region
          _
        $region40: #{gmm_forward.1} parent=11 // pred_fallthru
          _
        // Predicated region
        $region41: #{gmm_forward.1} parent=11 // pred_check
          %p274 = pneg %p212
        $region42: #{gmm_forward.1} parent=11 // pred_check_branch
          %276 = sbr.rel (%p274) target = $region44
        $region43: #{gmm_forward.1} parent=11 // pred_region
          _
        $region44: #{gmm_forward.1} parent=11 // pred_fallthru
          _
      $region12: #{gmm_forward.1} parent=5 // pred_fallthru
        _
      %p277 = scmp.lt.s32.totalorder %s18, 4
      // Predicated region
      $region45: #{gmm_forward.1} parent=5 // pred_check
        %p278 = pneg %p277
      $region46: #{gmm_forward.1} parent=5 // pred_check_branch
        %280 = sbr.rel (%p278) target = $region48
      $region47: #{gmm_forward.1} parent=5 // pred_region
        // Predicated region
        $region49: #{gmm_forward.1} parent=47 // pred_check
          %p281 = pneg %p38
        $region50: #{gmm_forward.1} parent=47 // pred_check_branch
          %283 = sbr.rel (%p281) target = $region52
        $region51: #{gmm_forward.1} parent=47 // pred_region
          %s284 = sand.u32 %s28, 1
          %s285 = sand.u32 %s28, 1
          %s286 = smul.addr %s285, 16
          %s287 = scalar_lea.vmem [#allocation2], %s286
          %s288 = smul.addr %s18, 8
          %s289 = scalar_lea.vmem %s0, %s288
          // Predicated region
          $region53: #{gmm_forward.1} parent=51 // pred_check
            _
          $region54: #{gmm_forward.1} parent=51 // pred_check_branch
            %291 = sbr.rel (0) target = $region56
          $region55: #{gmm_forward.1} parent=51 // pred_region
            // Predicated region
            $region57: #{gmm_forward.1} parent=55 // pred_check
              _
            $region58: #{gmm_forward.1} parent=55 // pred_check_branch
              %293 = sbr.rel (0) target = $region60
            $region59: #{gmm_forward.1} parent=55 // pred_region
              // Predicated region
              $region72: #{gmm_forward.1} parent=59 // pred_check
                _
              $region73: #{gmm_forward.1} parent=59 // pred_check_branch
                %311 = sbr.rel (0) target = $region75
              $region74: #{gmm_forward.1} parent=59 // pred_region
                loop: start=0, step=1, limit=1
                $region76: #{gmm_forward.1} parent=74 // loop_pre_header
                  _
                $region77: #{gmm_forward.1} parent=74 // loop_header
                  %s313 = sphi 0, %s317
                  %p314 = scmp.ge.s32.totalorder %s313, 1
                  %s318 = sphi %s289, %s289
                  %s319 = sphi %s287, %s287
                $region78: #{gmm_forward.1} parent=74 // loop_header_branch
                  %316 = sbr.rel (%p314) target = $region82
                $region79: #{gmm_forward.1} parent=74 // loop_body
                  %v320 = vld [vmem:[%s318] sm:$0xff]
                  %321 = vst [vmem:[%s319] sm:$0xff] %v320
                  %v322 = vld [vmem:[%s318 + $0x20] sm:$0xff]
                  %323 = vst [vmem:[%s319 + $0x8] sm:$0xff] %v322
                $region80: #{gmm_forward.1} parent=74 // loop_footer
                  %s317 = sadd.s32 1, %s313
                $region81: #{gmm_forward.1} parent=74 // loop_footer_branch
                  %312 = sbr.rel target = $region77
                $region82: #{gmm_forward.1} parent=74 // loop_exit
                  _
              $region75: #{gmm_forward.1} parent=59 // pred_fallthru
                _
              // Predicated region
              $region83: #{gmm_forward.1} parent=59 // pred_check
                _
              $region84: #{gmm_forward.1} parent=59 // pred_check_branch
                %325 = sbr.rel target = $region86
              $region85: #{gmm_forward.1} parent=59 // pred_region
                _
              $region86: #{gmm_forward.1} parent=59 // pred_fallthru
                _
            $region60: #{gmm_forward.1} parent=55 // pred_fallthru
              _
            // Predicated region
            $region61: #{gmm_forward.1} parent=55 // pred_check
              _
            $region62: #{gmm_forward.1} parent=55 // pred_check_branch
              %295 = sbr.rel target = $region64
            $region63: #{gmm_forward.1} parent=55 // pred_region
              %s297 = ssub.s32 256, 1
              loop: start=0, step=1, limit=1
              $region65: #{gmm_forward.1} parent=63 // loop_pre_header
                _
              $region66: #{gmm_forward.1} parent=63 // loop_header
                %s299 = sphi 0, %s303
                %p300 = scmp.ge.s32.totalorder %s299, 1
                %s304 = sphi %s289, %s289
                %s305 = sphi %s287, %s287
              $region67: #{gmm_forward.1} parent=63 // loop_header_branch
                %302 = sbr.rel (%p300) target = $region71
              $region68: #{gmm_forward.1} parent=63 // loop_body
                %v306 = vld [vmem:[%s304] sm:%s297]
                %307 = vst [vmem:[%s305] sm:%s297] %v306
                %v308 = vld [vmem:[%s304 + $0x20] sm:%s297]
                %309 = vst [vmem:[%s305 + $0x8] sm:%s297] %v308
              $region69: #{gmm_forward.1} parent=63 // loop_footer
                %s303 = sadd.s32 1, %s299
              $region70: #{gmm_forward.1} parent=63 // loop_footer_branch
                %298 = sbr.rel target = $region66
              $region71: #{gmm_forward.1} parent=63 // loop_exit
                _
            $region64: #{gmm_forward.1} parent=55 // pred_fallthru
              _
          $region56: #{gmm_forward.1} parent=51 // pred_fallthru
            _
          %326 = vnop
        $region52: #{gmm_forward.1} parent=47 // pred_fallthru
          _
      $region48: #{gmm_forward.1} parent=5 // pred_fallthru
        _
      %p327 = scmp.le.s32.totalorder 1, %s18
      %p328 = scmp.lt.s32.totalorder %s18, 5
      %p329 = pnand %p327, %p328
      %p330 = pneg %p329
      // Predicated region
      $region87: #{gmm_forward.1} parent=5 // pred_check
        _
      $region88: #{gmm_forward.1} parent=5 // pred_check_branch
        %332 = sbr.rel (%p329) target = $region90
      $region89: #{gmm_forward.1} parent=5 // pred_region
        %s333 = ssub.s32 %s18, 1
        %s334 = sand.u32 %s31, 1
        %s335 = sand.u32 %s31, 1
        %s336 = smul.addr %s335, 16
        %s337 = scalar_lea.vmem [#allocation2], %s336
        // Predicated region
        $region91: #{gmm_forward.1} parent=89 // pred_check
          %p338 = pneg %p44
        $region92: #{gmm_forward.1} parent=89 // pred_check_branch
          %340 = sbr.rel (%p338) target = $region94
        $region93: #{gmm_forward.1} parent=89 // pred_region
          _
        $region94: #{gmm_forward.1} parent=89 // pred_fallthru
          _
        %s341 = sand.u32 %s31, 1
        %s342 = sand.u32 %s31, 1
        %s343 = smul.addr %s342, 16
        %s344 = scalar_lea.vmem [#allocation2], %s343
        %p345 = pneg %p44
        %p346 = pneg %p41
        %p347 = pneg %p65
        %p348 = pneg %p62
        %p349 = pneg %p86
        %p350 = pneg %p83
        %p351 = pneg %p107
        %p352 = pneg %p104
        %p353 = pneg %p128
        %p354 = pneg %p125
        %p355 = pneg %p149
        %p356 = pneg %p146
        %p357 = pneg %p170
        %p358 = pneg %p167
        %p359 = pneg %p191
        %p360 = pneg %p188
        %p361 = pneg %p212
        %p362 = pneg %p209
        %p363 = pneg %p238
        %p364 = pneg %p235
        %s365 = sand.u32 %s225, 1
        %s366 = scalar_lea.sflag [#allocation4], %s365
        %s367 = sand.u32 %s225, 1
        %s368 = scalar_lea.vmem [#allocation3], %s367
        %v370 = vld [vmem:[%s337] sm:$0xff]
        %v371 = vld [vmem:[%s337 + $0x8] sm:$0x3]
        %v372 = vld [vmem:[%s337 + $0x8] sm:$0x1]
        %v373 = vld [vmem:[%s337 + $0x9] sm:$0x1]
        %v374 = vld [vmem:[%s337 + $0xa] sm:$0x3]
        %v375 = vld [vmem:[%s1] sm:$0xff]
        %v376 = vld [vmem:[%s1 + $0x8] sm:$0x3]
        %v377 = vlaneseq
        %v378 = vshrl.u32 %v377, 7
        %v379 = vsub.s32 0, %v378
        %v380 = vrot.slane %v372, %v379
        %382 = vset.pattern.permute.xlu0 0
        %383 = vperm.xlu0 %382, %v375
        %v384 = vpop.permute.xlu0 %383
        %387 = vset.pattern.permute.xlu0 0
        %388 = vperm.xlu0 %387, %v376
        %v389 = vpop.permute.xlu0 %388
        %v391 = vmul.f32 %v380, %v384
        %v392 = vmul.f32 %v380, %v389
        %v393 = vld [vmem:[%s2] sm:$0xff]
        %v394 = vld [vmem:[%s2 + $0x8] sm:$0x3]
        %v395 = vlaneseq
        %v396 = vshrl.u32 %v395, 7
        %v397 = vsub.s32 0, %v396
        %v398 = vrot.slane %v373, %v397
        %400 = vset.pattern.permute.xlu0 0
        %401 = vperm.xlu0 %400, %v393
        %v402 = vpop.permute.xlu0 %401
        %405 = vset.pattern.permute.xlu0 0
        %406 = vperm.xlu0 %405, %v394
        %v407 = vpop.permute.xlu0 %406
        %v409 = vmul.f32 %v398, %v402
        %v410 = vmul.f32 %v398, %v407
        %v411 = vadd.f32 %v391, %v409
        %v412 = vadd.f32 %v392, %v410
        %v413 = vand.u32 2147483647, %v411
        %vm414 = vcmp.le.f32.partialorder %v413, 0.7853982
        %vm415 = vcmp.lt.s32.totalorder %v411, 0
        %v416 = vand.u32 %v411, 2139095040
        %v417 = vshrl.u32 %v416, 23
        %v418 = vsub.s32 %v417, 127
        %v419 = vand.u32 2147483647, %v411
        %v420 = vand.u32 %v419, 8388607
        %v421 = vor.u32 %v420, 8388608
        %v422 = vsub.s32 0, %v421
        %v423 = vadd.s32 %v418, 1
        %vm424 = vcmp.gt.s32.totalorder %v423, 0
        %v425 = vsel %vm424, %v423, 0
        %v426 = vshrl.u32 %v425, 5
        %v427 = vand.u32 %v425, 31
        %v428 = vsub.s32 32, %v427
        %v429 = vshrl.u32 683565275, %v428
        %v430 = vshll.u32 683565275, %v427
        %v431 = vshrl.u32 2475754826, %v428
        %v432 = vor.u32 %v430, %v431
        %v433 = vshll.u32 2475754826, %v427
        %v434 = vshrl.u32 2131351028, %v428
        %v435 = vor.u32 %v433, %v434
        %v436 = vshll.u32 2131351028, %v427
        %v437 = vshrl.u32 2102212464, %v428
        %v438 = vor.u32 %v436, %v437
        %v439 = vshll.u32 2102212464, %v427
        %v440 = vshrl.u32 920167782, %v428
        %v441 = vor.u32 %v439, %v440
        %v442 = vshll.u32 920167782, %v427
        %v443 = vshrl.u32 1326507024, %v428
        %v444 = vor.u32 %v442, %v443
        %vm445 = vcmp.lt.s32.totalorder %v426, 1
        %vm446 = vcmp.lt.s32.totalorder %v426, 2
        %vm447 = vcmp.lt.s32.totalorder %v426, 3
        %vm448 = vcmp.lt.s32.totalorder %v426, 4
        %v449 = vsel %vm445, %v429, %v432
        %v450 = vsel %vm448, %v438, 2102212464
        %v451 = vsel %vm447, %v435, %v450
        %v452 = vsel %vm446, %v449, %v451
        %v453 = vsel %vm445, %v432, %v435
        %v454 = vsel %vm448, %v441, 920167782
        %v455 = vsel %vm447, %v438, %v454
        %v456 = vsel %vm446, %v453, %v455
        %v457 = vsel %vm445, %v435, %v438
        %v458 = vsel %vm448, %v444, 1326507024
        %v459 = vsel %vm447, %v441, %v458
        %v460 = vsel %vm446, %v457, %v459
        %v461 = vshll.u32 %v421, 8
        %v462 = vmul.u32.u64.compose %v461, %v460
        %v463 = vextract.low.u32 %v462
        %v464 = vextract.high.u32 %v462
        %v465 = vmul.u32.u64.compose %v461, %v456
        %v466 = vextract.low.u32 %v465
        %v467 = vextract.high.u32 %v465
        %v468 = vmul.u32 %v461, %v452
        %v469 = vadd.s32 %v464, %v466
        %vm470 = vc.u32 %v464, %v466
        %v471 = vadd.s32 %v467, 1
        %v472 = vsel %vm470, %v471, %v467
        %v473 = vadd.s32 %v468, %v472
        %v474 = vadd.s32 %v473, 536870912
        %v475 = vshrl.u32 %v474, 30
        %v476 = vshll.u32 %v475, 30
        %v477 = vsub.s32 %v473, %v476
        %vm478 = vcmp.lt.s32.totalorder %v477, 0
        %v479 = vsub.s32 0, %v477
        %v480 = vsel %vm478, %v479, %v477
        %v481 = vclz %v480
        %v482 = vsub.s32 %v481, 2
        %vm483 = vcmp.gt.s32.totalorder 0, %v482
        %v484 = vsel %vm483, 0, %v482
        %v485 = vsub.s32 32, %v484
        %v486 = vshll.u32 %v477, %v484
        %v487 = vshrl.u32 %v469, %v485
        %v488 = vor.u32 %v486, %v487
        %v489 = vsub.s32 4294967266, %v484
        %v490 = vadd.s32 %v489, 127
        %v491 = vshll.u32 %v490, 23
        %v492 = vor.u32 4788187, %v491
        %v493 = vand.u32 2147483647, %v492
        %v495 = vcvt.s32.f32 %v488
        %v496 = vmul.f32 %v495, %v493
        %v497 = vxor.u32 %v496, 2147483648
        %v498 = vsel %vm415, %v497, %v496
        %v499 = vsub.s32 4, %v475
        %v500 = vsel %vm415, %v499, %v475
        %v501 = vsel %vm414, %v411, %v498
        %v502 = vsel %vm414, 0, %v500
        %v503 = vcosq.f32.pop %v501
        %v504 = vsinq.f32.pop %v501
        %vm505 = vweird.f32 %v411
        %v506 = vadd.s32 %v502, 3
        %v507 = vand.u32 %v506, 3
        %vm508 = vcmp.lt.s32.totalorder %v507, 2
        %vm509 = vcmp.eq.s32.totalorder %v507, 0
        %v510 = vxor.u32 %v504, 2147483648
        %v511 = vsel %vm509, %v503, %v510
        %vm512 = vcmp.eq.s32.totalorder %v507, 2
        %v513 = vxor.u32 %v503, 2147483648
        %v514 = vsel %vm512, %v513, %v504
        %v515 = vsel %vm508, %v511, %v514
        %v516 = vsel %vm505, nan, %v515
        %v517 = vand.u32 2147483647, %v412
        %vm518 = vcmp.le.f32.partialorder %v517, 0.7853982
        %vm519 = vcmp.lt.s32.totalorder %v412, 0
        %v520 = vand.u32 %v412, 2139095040
        %v521 = vshrl.u32 %v520, 23
        %v522 = vsub.s32 %v521, 127
        %v523 = vand.u32 2147483647, %v412
        %v524 = vand.u32 %v523, 8388607
        %v525 = vor.u32 %v524, 8388608
        %v526 = vsub.s32 0, %v525
        %v527 = vadd.s32 %v522, 1
        %vm528 = vcmp.gt.s32.totalorder %v527, 0
        %v529 = vsel %vm528, %v527, 0
        %v530 = vshrl.u32 %v529, 5
        %v531 = vand.u32 %v529, 31
        %v532 = vsub.s32 32, %v531
        %v533 = vshrl.u32 683565275, %v532
        %v534 = vshll.u32 683565275, %v531
        %v535 = vshrl.u32 2475754826, %v532
        %v536 = vor.u32 %v534, %v535
        %v537 = vshll.u32 2475754826, %v531
        %v538 = vshrl.u32 2131351028, %v532
        %v539 = vor.u32 %v537, %v538
        %v540 = vshll.u32 2131351028, %v531
        %v541 = vshrl.u32 2102212464, %v532
        %v542 = vor.u32 %v540, %v541
        %v543 = vshll.u32 2102212464, %v531
        %v544 = vshrl.u32 920167782, %v532
        %v545 = vor.u32 %v543, %v544
        %v546 = vshll.u32 920167782, %v531
        %v547 = vshrl.u32 1326507024, %v532
        %v548 = vor.u32 %v546, %v547
        %vm549 = vcmp.lt.s32.totalorder %v530, 1
        %vm550 = vcmp.lt.s32.totalorder %v530, 2
        %vm551 = vcmp.lt.s32.totalorder %v530, 3
        %vm552 = vcmp.lt.s32.totalorder %v530, 4
        %v553 = vsel %vm549, %v533, %v536
        %v554 = vsel %vm552, %v542, 2102212464
        %v555 = vsel %vm551, %v539, %v554
        %v556 = vsel %vm550, %v553, %v555
        %v557 = vsel %vm549, %v536, %v539
        %v558 = vsel %vm552, %v545, 920167782
        %v559 = vsel %vm551, %v542, %v558
        %v560 = vsel %vm550, %v557, %v559
        %v561 = vsel %vm549, %v539, %v542
        %v562 = vsel %vm552, %v548, 1326507024
        %v563 = vsel %vm551, %v545, %v562
        %v564 = vsel %vm550, %v561, %v563
        %v565 = vshll.u32 %v525, 8
        %v566 = vmul.u32.u64.compose %v565, %v564
        %v567 = vextract.low.u32 %v566
        %v568 = vextract.high.u32 %v566
        %v569 = vmul.u32.u64.compose %v565, %v560
        %v570 = vextract.low.u32 %v569
        %v571 = vextract.high.u32 %v569
        %v572 = vmul.u32 %v565, %v556
        %v573 = vadd.s32 %v568, %v570
        %vm574 = vc.u32 %v568, %v570
        %v575 = vadd.s32 %v571, 1
        %v576 = vsel %vm574, %v575, %v571
        %v577 = vadd.s32 %v572, %v576
        %v578 = vadd.s32 %v577, 536870912
        %v579 = vshrl.u32 %v578, 30
        %v580 = vshll.u32 %v579, 30
        %v581 = vsub.s32 %v577, %v580
        %vm582 = vcmp.lt.s32.totalorder %v581, 0
        %v583 = vsub.s32 0, %v581
        %v584 = vsel %vm582, %v583, %v581
        %v585 = vclz %v584
        %v586 = vsub.s32 %v585, 2
        %vm587 = vcmp.gt.s32.totalorder 0, %v586
        %v588 = vsel %vm587, 0, %v586
        %v589 = vsub.s32 32, %v588
        %v590 = vshll.u32 %v581, %v588
        %v591 = vshrl.u32 %v573, %v589
        %v592 = vor.u32 %v590, %v591
        %v593 = vsub.s32 4294967266, %v588
        %v594 = vadd.s32 %v593, 127
        %v595 = vshll.u32 %v594, 23
        %v596 = vor.u32 4788187, %v595
        %v597 = vand.u32 2147483647, %v596
        %v599 = vcvt.s32.f32 %v592
        %v600 = vmul.f32 %v599, %v597
        %v601 = vxor.u32 %v600, 2147483648
        %v602 = vsel %vm519, %v601, %v600
        %v603 = vsub.s32 4, %v579
        %v604 = vsel %vm519, %v603, %v579
        %v605 = vsel %vm518, %v412, %v602
        %v606 = vsel %vm518, 0, %v604
        %v607 = vcosq.f32.pop %v605
        %v608 = vsinq.f32.pop %v605
        %vm609 = vweird.f32 %v412
        %v610 = vadd.s32 %v606, 3
        %v611 = vand.u32 %v610, 3
        %vm612 = vcmp.lt.s32.totalorder %v611, 2
        %vm613 = vcmp.eq.s32.totalorder %v611, 0
        %v614 = vxor.u32 %v608, 2147483648
        %v615 = vsel %vm613, %v607, %v614
        %vm616 = vcmp.eq.s32.totalorder %v611, 2
        %v617 = vxor.u32 %v607, 2147483648
        %v618 = vsel %vm616, %v617, %v608
        %v619 = vsel %vm612, %v615, %v618
        %v620 = vsel %vm609, nan, %v619
        %v621 = vand.u32 2147483647, %v411
        %vm622 = vcmp.le.f32.partialorder %v621, 0.7853982
        %vm623 = vcmp.lt.s32.totalorder %v411, 0
        %v624 = vand.u32 %v411, 2139095040
        %v625 = vshrl.u32 %v624, 23
        %v626 = vsub.s32 %v625, 127
        %v627 = vand.u32 2147483647, %v411
        %v628 = vand.u32 %v627, 8388607
        %v629 = vor.u32 %v628, 8388608
        %v630 = vsub.s32 0, %v629
        %v631 = vadd.s32 %v626, 1
        %vm632 = vcmp.gt.s32.totalorder %v631, 0
        %v633 = vsel %vm632, %v631, 0
        %v634 = vshrl.u32 %v633, 5
        %v635 = vand.u32 %v633, 31
        %v636 = vsub.s32 32, %v635
        %v637 = vshrl.u32 683565275, %v636
        %v638 = vshll.u32 683565275, %v635
        %v639 = vshrl.u32 2475754826, %v636
        %v640 = vor.u32 %v638, %v639
        %v641 = vshll.u32 2475754826, %v635
        %v642 = vshrl.u32 2131351028, %v636
        %v643 = vor.u32 %v641, %v642
        %v644 = vshll.u32 2131351028, %v635
        %v645 = vshrl.u32 2102212464, %v636
        %v646 = vor.u32 %v644, %v645
        %v647 = vshll.u32 2102212464, %v635
        %v648 = vshrl.u32 920167782, %v636
        %v649 = vor.u32 %v647, %v648
        %v650 = vshll.u32 920167782, %v635
        %v651 = vshrl.u32 1326507024, %v636
        %v652 = vor.u32 %v650, %v651
        %vm653 = vcmp.lt.s32.totalorder %v634, 1
        %vm654 = vcmp.lt.s32.totalorder %v634, 2
        %vm655 = vcmp.lt.s32.totalorder %v634, 3
        %vm656 = vcmp.lt.s32.totalorder %v634, 4
        %v657 = vsel %vm653, %v637, %v640
        %v658 = vsel %vm656, %v646, 2102212464
        %v659 = vsel %vm655, %v643, %v658
        %v660 = vsel %vm654, %v657, %v659
        %v661 = vsel %vm653, %v640, %v643
        %v662 = vsel %vm656, %v649, 920167782
        %v663 = vsel %vm655, %v646, %v662
        %v664 = vsel %vm654, %v661, %v663
        %v665 = vsel %vm653, %v643, %v646
        %v666 = vsel %vm656, %v652, 1326507024
        %v667 = vsel %vm655, %v649, %v666
        %v668 = vsel %vm654, %v665, %v667
        %v669 = vshll.u32 %v629, 8
        %v670 = vmul.u32.u64.compose %v669, %v668
        %v671 = vextract.low.u32 %v670
        %v672 = vextract.high.u32 %v670
        %v673 = vmul.u32.u64.compose %v669, %v664
        %v674 = vextract.low.u32 %v673
        %v675 = vextract.high.u32 %v673
        %v676 = vmul.u32 %v669, %v660
        %v677 = vadd.s32 %v672, %v674
        %vm678 = vc.u32 %v672, %v674
        %v679 = vadd.s32 %v675, 1
        %v680 = vsel %vm678, %v679, %v675
        %v681 = vadd.s32 %v676, %v680
        %v682 = vadd.s32 %v681, 536870912
        %v683 = vshrl.u32 %v682, 30
        %v684 = vshll.u32 %v683, 30
        %v685 = vsub.s32 %v681, %v684
        %vm686 = vcmp.lt.s32.totalorder %v685, 0
        %v687 = vsub.s32 0, %v685
        %v688 = vsel %vm686, %v687, %v685
        %v689 = vclz %v688
        %v690 = vsub.s32 %v689, 2
        %vm691 = vcmp.gt.s32.totalorder 0, %v690
        %v692 = vsel %vm691, 0, %v690
        %v693 = vsub.s32 32, %v692
        %v694 = vshll.u32 %v685, %v692
        %v695 = vshrl.u32 %v677, %v693
        %v696 = vor.u32 %v694, %v695
        %v697 = vsub.s32 4294967266, %v692
        %v698 = vadd.s32 %v697, 127
        %v699 = vshll.u32 %v698, 23
        %v700 = vor.u32 4788187, %v699
        %v701 = vand.u32 2147483647, %v700
        %v703 = vcvt.s32.f32 %v696
        %v704 = vmul.f32 %v703, %v701
        %v705 = vxor.u32 %v704, 2147483648
        %v706 = vsel %vm623, %v705, %v704
        %v707 = vsub.s32 4, %v683
        %v708 = vsel %vm623, %v707, %v683
        %v709 = vsel %vm622, %v411, %v706
        %v710 = vsel %vm622, 0, %v708
        %v711 = vcosq.f32.pop %v709
        %v712 = vsinq.f32.pop %v709
        %vm713 = vweird.f32 %v411
        %v714 = vand.u32 %v710, 3
        %vm715 = vcmp.lt.s32.totalorder %v714, 2
        %vm716 = vcmp.eq.s32.totalorder %v714, 0
        %v717 = vxor.u32 %v712, 2147483648
        %v718 = vsel %vm716, %v711, %v717
        %vm719 = vcmp.eq.s32.totalorder %v714, 2
        %v720 = vxor.u32 %v711, 2147483648
        %v721 = vsel %vm719, %v720, %v712
        %v722 = vsel %vm715, %v718, %v721
        %v723 = vsel %vm713, nan, %v722
        %v724 = vand.u32 2147483647, %v412
        %vm725 = vcmp.le.f32.partialorder %v724, 0.7853982
        %vm726 = vcmp.lt.s32.totalorder %v412, 0
        %v727 = vand.u32 %v412, 2139095040
        %v728 = vshrl.u32 %v727, 23
        %v729 = vsub.s32 %v728, 127
        %v730 = vand.u32 2147483647, %v412
        %v731 = vand.u32 %v730, 8388607
        %v732 = vor.u32 %v731, 8388608
        %v733 = vsub.s32 0, %v732
        %v734 = vadd.s32 %v729, 1
        %vm735 = vcmp.gt.s32.totalorder %v734, 0
        %v736 = vsel %vm735, %v734, 0
        %v737 = vshrl.u32 %v736, 5
        %v738 = vand.u32 %v736, 31
        %v739 = vsub.s32 32, %v738
        %v740 = vshrl.u32 683565275, %v739
        %v741 = vshll.u32 683565275, %v738
        %v742 = vshrl.u32 2475754826, %v739
        %v743 = vor.u32 %v741, %v742
        %v744 = vshll.u32 2475754826, %v738
        %v745 = vshrl.u32 2131351028, %v739
        %v746 = vor.u32 %v744, %v745
        %v747 = vshll.u32 2131351028, %v738
        %v748 = vshrl.u32 2102212464, %v739
        %v749 = vor.u32 %v747, %v748
        %v750 = vshll.u32 2102212464, %v738
        %v751 = vshrl.u32 920167782, %v739
        %v752 = vor.u32 %v750, %v751
        %v753 = vshll.u32 920167782, %v738
        %v754 = vshrl.u32 1326507024, %v739
        %v755 = vor.u32 %v753, %v754
        %vm756 = vcmp.lt.s32.totalorder %v737, 1
        %vm757 = vcmp.lt.s32.totalorder %v737, 2
        %vm758 = vcmp.lt.s32.totalorder %v737, 3
        %vm759 = vcmp.lt.s32.totalorder %v737, 4
        %v760 = vsel %vm756, %v740, %v743
        %v761 = vsel %vm759, %v749, 2102212464
        %v762 = vsel %vm758, %v746, %v761
        %v763 = vsel %vm757, %v760, %v762
        %v764 = vsel %vm756, %v743, %v746
        %v765 = vsel %vm759, %v752, 920167782
        %v766 = vsel %vm758, %v749, %v765
        %v767 = vsel %vm757, %v764, %v766
        %v768 = vsel %vm756, %v746, %v749
        %v769 = vsel %vm759, %v755, 1326507024
        %v770 = vsel %vm758, %v752, %v769
        %v771 = vsel %vm757, %v768, %v770
        %v772 = vshll.u32 %v732, 8
        %v773 = vmul.u32.u64.compose %v772, %v771
        %v774 = vextract.low.u32 %v773
        %v775 = vextract.high.u32 %v773
        %v776 = vmul.u32.u64.compose %v772, %v767
        %v777 = vextract.low.u32 %v776
        %v778 = vextract.high.u32 %v776
        %v779 = vmul.u32 %v772, %v763
        %v780 = vadd.s32 %v775, %v777
        %vm781 = vc.u32 %v775, %v777
        %v782 = vadd.s32 %v778, 1
        %v783 = vsel %vm781, %v782, %v778
        %v784 = vadd.s32 %v779, %v783
        %v785 = vadd.s32 %v784, 536870912
        %v786 = vshrl.u32 %v785, 30
        %v787 = vshll.u32 %v786, 30
        %v788 = vsub.s32 %v784, %v787
        %vm789 = vcmp.lt.s32.totalorder %v788, 0
        %v790 = vsub.s32 0, %v788
        %v791 = vsel %vm789, %v790, %v788
        %v792 = vclz %v791
        %v793 = vsub.s32 %v792, 2
        %vm794 = vcmp.gt.s32.totalorder 0, %v793
        %v795 = vsel %vm794, 0, %v793
        %v796 = vsub.s32 32, %v795
        %v797 = vshll.u32 %v788, %v795
        %v798 = vshrl.u32 %v780, %v796
        %v799 = vor.u32 %v797, %v798
        %v800 = vsub.s32 4294967266, %v795
        %v801 = vadd.s32 %v800, 127
        %v802 = vshll.u32 %v801, 23
        %v803 = vor.u32 4788187, %v802
        %v804 = vand.u32 2147483647, %v803
        %v806 = vcvt.s32.f32 %v799
        %v807 = vmul.f32 %v806, %v804
        %v808 = vxor.u32 %v807, 2147483648
        %v809 = vsel %vm726, %v808, %v807
        %v810 = vsub.s32 4, %v786
        %v811 = vsel %vm726, %v810, %v786
        %v812 = vsel %vm725, %v412, %v809
        %v813 = vsel %vm725, 0, %v811
        %v814 = vcosq.f32.pop %v812
        %v815 = vsinq.f32.pop %v812
        %vm816 = vweird.f32 %v412
        %v817 = vand.u32 %v813, 3
        %vm818 = vcmp.lt.s32.totalorder %v817, 2
        %vm819 = vcmp.eq.s32.totalorder %v817, 0
        %v820 = vxor.u32 %v815, 2147483648
        %v821 = vsel %vm819, %v814, %v820
        %vm822 = vcmp.eq.s32.totalorder %v817, 2
        %v823 = vxor.u32 %v814, 2147483648
        %v824 = vsel %vm822, %v823, %v815
        %v825 = vsel %vm818, %v821, %v824
        %v826 = vsel %vm816, nan, %v825
        %v827 = vld [vmem:[%s3] sm:$0xf]
        %v828 = vld [vmem:[%s3 + $0x4] sm:$0xf]
        %v829 = vld [vmem:[%s3 + $0x8] sm:$0xf]
        %v830 = vld [vmem:[%s3 + $0xc] sm:$0xf]
        %v831 = vpack.c.bf16 %v620, %v516
        %v832 = vld [vmem:[%s4] sm:$0xf]
        %v833 = vld [vmem:[%s4 + $0x4] sm:$0xf]
        %v834 = vld [vmem:[%s4 + $0x8] sm:$0xf]
        %v835 = vld [vmem:[%s4 + $0xc] sm:$0xf]
        %v836 = vpack.c.bf16 %v826, %v723
        %v841 = vunpack.c.l.b16 %v832
        %v842 = vunpack.c.l.b16 %v833
        %v843 = vunpack.c.l.b16 %v834
        %v844 = vunpack.c.l.b16 %v835
        %v845 = vpack.c.b16 %v842, %v841
        %v846 = vpack.c.b16 %v844, %v843
        %vm847 = vcmask 80896
        %v849 = vsel %vm847, %v845, 0
        %v852 = vsel %vm847, %v846, 0
        %vm854 = vcmask 1044480
        %v856 = vsel %vm854, %v836, 0
        %858 = vmatprep.subr.bf16.mxu0 0
        %859 = vmatpush1.bf16.msra.mxu0 0
        %860 = vmatprep.subr.bf16.mxu0 0
        %861 = vmatpush1.bf16.msra.mxu0 0
        %862 = vmatprep.subr.bf16.mxu0 0
        %863 = vmatpush1.bf16.msra.mxu0 0
        %864 = vmatprep.subr.bf16.mxu0 0
        %865 = vmatpush1.bf16.msra.mxu0 0
        %866 = vmatprep.subr.bf16.mxu0 0
        %867 = vmatpush1.bf16.msra.mxu0 0
        %868 = vmatprep.subr.bf16.mxu0 0
        %869 = vmatpush1.bf16.msra.mxu0 0
        %870 = vmatprep.subr.bf16.mxu0 0
        %871 = vmatpush1.bf16.msra.mxu0 0
        %872 = vmatprep.subr.bf16.mxu0 0
        %873 = vmatpush1.bf16.msra.mxu0 %v856
        %874 = vmatprep.subr.bf16.mxu0 0
        %875 = vmatpush2.bf16.msra.mxu0 0
        %876 = vmatprep.subr.bf16.mxu0 0
        %877 = vmatpush2.bf16.msra.mxu0 0
        %878 = vmatprep.subr.bf16.mxu0 0
        %879 = vmatpush2.bf16.msra.mxu0 0
        %880 = vmatprep.subr.bf16.mxu0 0
        %881 = vmatpush2.bf16.msra.mxu0 0
        %882 = vmatprep.subr.bf16.mxu0 0
        %883 = vmatpush2.bf16.msra.mxu0 0
        %884 = vmatprep.subr.bf16.mxu0 0
        %885 = vmatpush2.bf16.msra.mxu0 0
        %886 = vmatprep.subr.bf16.mxu0 0
        %887 = vmatpush2.bf16.msra.mxu0 0
        %888 = vmatprep.subr.bf16.mxu0 0
        %889 = vmatpush2.bf16.msra.mxu0 0
        %890 = vmatprep.mubr.bf16.mxu0 0
        %891 = vmatmul.mubr.bf16.gmra.mxu0 %v849
        %v892 = vpop.f32.mrf.mxu0
        %v893 = vadd.f32 0.0, %v892
        %v894 = vpop.f32.mrf.mxu0
        %v895 = vpop.f32.mrf.mxu0
        %v896 = vadd.f32 0.0, %v895
        %v897 = vpop.f32.mrf.mxu0
        %898 = vmatprep.mubr.bf16.mxu0 0
        %899 = vmatmul.mubr.bf16.gmra.mxu0 %v852
        %v900 = vpop.f32.mrf.mxu0
        %v901 = vadd.f32 0.0, %v900
        %v902 = vpop.f32.mrf.mxu0
        %v903 = vpop.f32.mrf.mxu0
        %v904 = vadd.f32 0.0, %v903
        %v905 = vpop.f32.mrf.mxu0
        %906 = vdwg.mxu0
        %v911 = vunpack.c.l.b16 %v827
        %v912 = vunpack.c.l.b16 %v828
        %v913 = vunpack.c.l.b16 %v829
        %v914 = vunpack.c.l.b16 %v830
        %v915 = vpack.c.b16 %v912, %v911
        %v916 = vpack.c.b16 %v914, %v913
        %v918 = vsel %vm847, %v915, 0
        %v921 = vsel %vm847, %v916, 0
        %v924 = vsel %vm854, %v831, 0
        %926 = vmatprep.subr.bf16.mxu0 0
        %927 = vmatpush1.bf16.msra.mxu0 0
        %928 = vmatprep.subr.bf16.mxu0 0
        %929 = vmatpush1.bf16.msra.mxu0 0
        %930 = vmatprep.subr.bf16.mxu0 0
        %931 = vmatpush1.bf16.msra.mxu0 0
        %932 = vmatprep.subr.bf16.mxu0 0
        %933 = vmatpush1.bf16.msra.mxu0 0
        %934 = vmatprep.subr.bf16.mxu0 0
        %935 = vmatpush1.bf16.msra.mxu0 0
        %936 = vmatprep.subr.bf16.mxu0 0
        %937 = vmatpush1.bf16.msra.mxu0 0
        %938 = vmatprep.subr.bf16.mxu0 0
        %939 = vmatpush1.bf16.msra.mxu0 0
        %940 = vmatprep.subr.bf16.mxu0 0
        %941 = vmatpush1.bf16.msra.mxu0 %v924
        %942 = vmatprep.subr.bf16.mxu0 0
        %943 = vmatpush2.bf16.msra.mxu0 0
        %944 = vmatprep.subr.bf16.mxu0 0
        %945 = vmatpush2.bf16.msra.mxu0 0
        %946 = vmatprep.subr.bf16.mxu0 0
        %947 = vmatpush2.bf16.msra.mxu0 0
        %948 = vmatprep.subr.bf16.mxu0 0
        %949 = vmatpush2.bf16.msra.mxu0 0
        %950 = vmatprep.subr.bf16.mxu0 0
        %951 = vmatpush2.bf16.msra.mxu0 0
        %952 = vmatprep.subr.bf16.mxu0 0
        %953 = vmatpush2.bf16.msra.mxu0 0
        %954 = vmatprep.subr.bf16.mxu0 0
        %955 = vmatpush2.bf16.msra.mxu0 0
        %956 = vmatprep.subr.bf16.mxu0 0
        %957 = vmatpush2.bf16.msra.mxu0 0
        %958 = vmatprep.mubr.bf16.mxu0 0
        %959 = vmatmul.mubr.bf16.gmra.mxu0 %v918
        %v960 = vpop.f32.mrf.mxu0
        %v961 = vadd.f32 %v893, %v960
        %v962 = vpop.f32.mrf.mxu0
        %v963 = vpop.f32.mrf.mxu0
        %v964 = vadd.f32 %v896, %v963
        %v965 = vpop.f32.mrf.mxu0
        %966 = vmatprep.mubr.bf16.mxu0 0
        %967 = vmatmul.mubr.bf16.gmra.mxu0 %v921
        %v968 = vpop.f32.mrf.mxu0
        %v969 = vadd.f32 %v901, %v968
        %v970 = vpop.f32.mrf.mxu0
        %v971 = vpop.f32.mrf.mxu0
        %v972 = vadd.f32 %v904, %v971
        %v973 = vpop.f32.mrf.mxu0
        %974 = vdwg.mxu0
        %v975 = vld [vmem:[%s5] sm:$0xf]
        %v976 = vld [vmem:[%s5 + $0x4] sm:$0xf]
        %v977 = vld [vmem:[%s5 + $0x8] sm:$0xf]
        %v978 = vld [vmem:[%s5 + $0xc] sm:$0xf]
        %v979 = vpack.c.bf16 %v371, %v370
        %v984 = vunpack.c.l.b16 %v975
        %v985 = vunpack.c.l.b16 %v976
        %v986 = vunpack.c.l.b16 %v977
        %v987 = vunpack.c.l.b16 %v978
        %v988 = vpack.c.b16 %v985, %v984
        %v989 = vpack.c.b16 %v987, %v986
        %v991 = vsel %vm847, %v988, 0
        %v994 = vsel %vm847, %v989, 0
        %v997 = vsel %vm854, %v979, 0
        %999 = vmatprep.subr.bf16.mxu0 0
        %1000 = vmatpush1.bf16.msra.mxu0 0
        %1001 = vmatprep.subr.bf16.mxu0 0
        %1002 = vmatpush1.bf16.msra.mxu0 0
        %1003 = vmatprep.subr.bf16.mxu0 0
        %1004 = vmatpush1.bf16.msra.mxu0 0
        %1005 = vmatprep.subr.bf16.mxu0 0
        %1006 = vmatpush1.bf16.msra.mxu0 0
        %1007 = vmatprep.subr.bf16.mxu0 0
        %1008 = vmatpush1.bf16.msra.mxu0 0
        %1009 = vmatprep.subr.bf16.mxu0 0
        %1010 = vmatpush1.bf16.msra.mxu0 0
        %1011 = vmatprep.subr.bf16.mxu0 0
        %1012 = vmatpush1.bf16.msra.mxu0 0
        %1013 = vmatprep.subr.bf16.mxu0 0
        %1014 = vmatpush1.bf16.msra.mxu0 %v997
        %1015 = vmatprep.subr.bf16.mxu0 0
        %1016 = vmatpush2.bf16.msra.mxu0 0
        %1017 = vmatprep.subr.bf16.mxu0 0
        %1018 = vmatpush2.bf16.msra.mxu0 0
        %1019 = vmatprep.subr.bf16.mxu0 0
        %1020 = vmatpush2.bf16.msra.mxu0 0
        %1021 = vmatprep.subr.bf16.mxu0 0
        %1022 = vmatpush2.bf16.msra.mxu0 0
        %1023 = vmatprep.subr.bf16.mxu0 0
        %1024 = vmatpush2.bf16.msra.mxu0 0
        %1025 = vmatprep.subr.bf16.mxu0 0
        %1026 = vmatpush2.bf16.msra.mxu0 0
        %1027 = vmatprep.subr.bf16.mxu0 0
        %1028 = vmatpush2.bf16.msra.mxu0 0
        %1029 = vmatprep.subr.bf16.mxu0 0
        %1030 = vmatpush2.bf16.msra.mxu0 0
        %1031 = vmatprep.mubr.bf16.mxu0 0
        %1032 = vmatmul.mubr.bf16.gmra.mxu0 %v991
        %v1033 = vpop.f32.mrf.mxu0
        %v1034 = vadd.f32 0.0, %v1033
        %v1035 = vpop.f32.mrf.mxu0
        %v1036 = vpop.f32.mrf.mxu0
        %v1037 = vadd.f32 0.0, %v1036
        %v1038 = vpop.f32.mrf.mxu0
        %1039 = vmatprep.mubr.bf16.mxu0 0
        %1040 = vmatmul.mubr.bf16.gmra.mxu0 %v994
        %v1041 = vpop.f32.mrf.mxu0
        %v1042 = vadd.f32 0.0, %v1041
        %v1043 = vpop.f32.mrf.mxu0
        %v1044 = vpop.f32.mrf.mxu0
        %v1045 = vadd.f32 0.0, %v1044
        %v1046 = vpop.f32.mrf.mxu0
        %1047 = vdwg.mxu0
        %v1048 = vadd.f32 %v961, %v1034
        %v1049 = vadd.f32 %v964, %v1037
        %v1050 = vadd.f32 %v969, %v1042
        %v1051 = vadd.f32 %v972, %v1045
        %v1052 = vld [vmem:[%s6] sm:$0xff]
        %v1053 = vld [vmem:[%s6 + $0x8] sm:$0xff]
        %v1054 = vld [vmem:[%s6 + $0x10] sm:$0xff]
        %v1055 = vld [vmem:[%s6 + $0x18] sm:$0xff]
        %1057 = vset.pattern.permute.xlu0 0
        %1058 = vperm.xlu0 %1057, %v1052
        %v1059 = vpop.permute.xlu0 %1058
        %1062 = vset.pattern.permute.xlu0 0
        %1063 = vperm.xlu0 %1062, %v1053
        %v1064 = vpop.permute.xlu0 %1063
        %1067 = vset.pattern.permute.xlu0 0
        %1068 = vperm.xlu0 %1067, %v1054
        %v1069 = vpop.permute.xlu0 %1068
        %1072 = vset.pattern.permute.xlu0 0
        %1073 = vperm.xlu0 %1072, %v1055
        %v1074 = vpop.permute.xlu0 %1073
        %v1076 = vadd.f32 %v1048, %v1059
        %v1077 = vadd.f32 %v1049, %v1064
        %v1078 = vadd.f32 %v1050, %v1069
        %v1079 = vadd.f32 %v1051, %v1074
        %v1080 = vmax.f32 %v1076, 0.0
        %v1081 = vmax.f32 %v1077, 0.0
        %v1082 = vmax.f32 %v1078, 0.0
        %v1083 = vmax.f32 %v1079, 0.0
        %v1084 = vld [vmem:[%s7] sm:$0xf]
        %v1085 = vld [vmem:[%s7 + $0x4] sm:$0xf]
        %v1086 = vpack.c.bf16 %v1081, %v1080
        %v1087 = vpack.c.bf16 %v1083, %v1082
        %v1088 = vld [vmem:[%s8] sm:$0xff]
        %v1089 = vld [vmem:[%s8 + $0x8] sm:$0xff]
        %1091 = vset.pattern.permute.xlu0 0
        %1092 = vperm.xlu0 %1091, %v1088
        %v1093 = vpop.permute.xlu0 %1092
        %1096 = vset.pattern.permute.xlu0 0
        %1097 = vperm.xlu0 %1096, %v1089
        %v1098 = vpop.permute.xlu0 %1097
        %v1102 = vunpack.c.l.b16 %v1084
        %v1103 = vunpack.c.l.b16 %v1085
        %v1104 = vpack.c.b16 %v1103, %v1102
        %vm1105 = vcmask 261120
        %v1107 = vsel %vm1105, %v1104, 0
        %1109 = vmatprep.subr.bf16.mxu0 0
        %1110 = vmatpush1.bf16.msra.mxu0 0
        %1111 = vmatprep.subr.bf16.mxu0 0
        %1112 = vmatpush1.bf16.msra.mxu0 0
        %1113 = vmatprep.subr.bf16.mxu0 0
        %1114 = vmatpush1.bf16.msra.mxu0 0
        %1115 = vmatprep.subr.bf16.mxu0 0
        %1116 = vmatpush1.bf16.msra.mxu0 0
        %1117 = vmatprep.subr.bf16.mxu0 0
        %1118 = vmatpush1.bf16.msra.mxu0 0
        %1119 = vmatprep.subr.bf16.mxu0 0
        %1120 = vmatpush1.bf16.msra.mxu0 0
        %1121 = vmatprep.subr.bf16.mxu0 0
        %1122 = vmatpush1.bf16.msra.mxu0 %v1087
        %1123 = vmatprep.subr.bf16.mxu0 0
        %1124 = vmatpush1.bf16.msra.mxu0 %v1086
        %1125 = vmatprep.subr.bf16.mxu0 0
        %1126 = vmatpush2.bf16.msra.mxu0 0
        %1127 = vmatprep.subr.bf16.mxu0 0
        %1128 = vmatpush2.bf16.msra.mxu0 0
        %1129 = vmatprep.subr.bf16.mxu0 0
        %1130 = vmatpush2.bf16.msra.mxu0 0
        %1131 = vmatprep.subr.bf16.mxu0 0
        %1132 = vmatpush2.bf16.msra.mxu0 0
        %1133 = vmatprep.subr.bf16.mxu0 0
        %1134 = vmatpush2.bf16.msra.mxu0 0
        %1135 = vmatprep.subr.bf16.mxu0 0
        %1136 = vmatpush2.bf16.msra.mxu0 0
        %1137 = vmatprep.subr.bf16.mxu0 0
        %1138 = vmatpush2.bf16.msra.mxu0 0
        %1139 = vmatprep.subr.bf16.mxu0 0
        %1140 = vmatpush2.bf16.msra.mxu0 0
        %1141 = vmatprep.mubr.bf16.mxu0 0
        %1142 = vmatmul.mubr.bf16.gmra.mxu0 %v1107
        %v1143 = vpop.f32.mrf.mxu0
        %v1144 = vadd.f32 %v1093, %v1143
        %v1145 = vpop.f32.mrf.mxu0
        %v1146 = vpop.f32.mrf.mxu0
        %v1147 = vadd.f32 %v1098, %v1146
        %v1148 = vpop.f32.mrf.mxu0
        %1149 = vdwg.mxu0
        %v1150 = vsub.f32 0.0, %v1144
        %v1151 = vmul.f32 %v1150, 1.442695
        %v1152 = vpow.pop %v1151
        %v1153 = vand.u32 2147483647, %v1147
        %v1155 = vrot.slane %v1153, 1
        %v1157 = vadd.f32 %v1153, %v1155
        %v1158 = vrot.slane %v1153, 2
        %v1160 = vadd.f32 %v1157, %v1158
        %v1161 = vmax.f32 %v1160, 1e-12
        %v1162 = vrcp.pop %v1161
        %v1163 = vsub.f32 %v374, %v1144
        %v1165 = vrot.slane %v1152, 4
        %v1167 = vmul.f32 %v1163, %v1165
        %v1168 = vmul.f32 %v1167, %v1167
        %v1170 = vrot.slane %v1168, 1
        %v1172 = vadd.f32 %v1168, %v1170
        %v1173 = vrot.slane %v1152, 1
        %v1175 = vmul.f32 %v1152, %v1173
        %v1176 = vmul.f32 %v1172, -0.5
        %v1177 = vmul.f32 %v1176, 1.442695
        %v1178 = vpow.pop %v1177
        %v1179 = vmul.f32 %v1153, %v1178
        %v1181 = vrot.slane %v1175, 4
        %v1183 = vmul.f32 %v1179, %v1181
        %v1184 = vadd.f32 %v1183, 0.0
        %v1186 = vrot.slane %v1144, 2
        %v1188 = vsub.f32 %v374, %v1186
        %v1189 = vrot.slane %v1152, 6
        %v1191 = vmul.f32 %v1188, %v1189
        %v1192 = vmul.f32 %v1191, %v1191
        %v1194 = vrot.slane %v1192, 1
        %v1196 = vadd.f32 %v1192, %v1194
        %v1197 = vmul.f32 %v1196, -0.5
        %v1198 = vmul.f32 %v1197, 1.442695
        %v1199 = vpow.pop %v1198
        %v1201 = vrot.slane %v1199, 7
        %v1203 = vmul.f32 %v1153, %v1201
        %v1204 = vrot.slane %v1175, 5
        %v1206 = vmul.f32 %v1203, %v1204
        %v1208 = vrot.slane %v1206, 1
        %v1210 = vadd.f32 %v1184, %v1208
        %v1211 = vmul.f32 %v374, %v374
        %v1213 = vrot.slane %v1211, 1
        %v1215 = vadd.f32 %v1211, %v1213
        %vm1216 = vcmp.le.f32.partialorder %v1215, 1.0
        %v1217 = vsel %vm1216, 1.0, 0.0
        %v1218 = vmul.f32 %v1153, 2.0
        %v1220 = vrot.slane %v1217, 6
        %v1222 = vmul.f32 %v1218, %v1220
        %v1224 = vrot.slane %v1222, 2
        %v1226 = vadd.f32 %v1210, %v1224
        %v1227 = vmul.f32 %v1162, 0.15915494
        %v1228 = vmul.f32 %v1226, %v1227
        %1229 = vst [vmem:[%s368] sm:$0x1] %v1228
        %s1230 = sand.u32 %s225, 1
        %s1231 = scalar_lea.sflag [#allocation4], %s1230
        %s1232 = sand.u32 %s225, 1
        %s1233 = scalar_lea.vmem [#allocation3], %s1232
        // Predicated region
        $region95: #{gmm_forward.1} parent=89 // pred_check
          %p1234 = pneg %p235
        $region96: #{gmm_forward.1} parent=89 // pred_check_branch
          %1236 = sbr.rel (%p1234) target = $region98
        $region97: #{gmm_forward.1} parent=89 // pred_region
          %s1238 = ssub.s32 16, 16
          %1239 = vsyncadd %s1231, %s1238
          %s1240 = smul.addr %s23, 16
          %s1241 = scalar_lea.hbm %s9, %s1240
          %s1243 = sshll.u32 %s1233, 4
          %s1244 = int_to_ptr.vmem [resolvable:$true] %s1243
          %1246 = dma.vmem_to_hbm [thread:$0]  %s1244, 16, %s1241, %s1231
        $region98: #{gmm_forward.1} parent=89 // pred_fallthru
          _
      $region90: #{gmm_forward.1} parent=5 // pred_fallthru
        _
      %p1247 = scmp.le.s32.totalorder 2, %s18
      // Predicated region
      $region99: #{gmm_forward.1} parent=5 // pred_check
        %p1248 = pneg %p1247
      $region100: #{gmm_forward.1} parent=5 // pred_check_branch
        %1250 = sbr.rel (%p1248) target = $region102
      $region101: #{gmm_forward.1} parent=5 // pred_region
        %s1251 = ssub.s32 %s18, 2
        // Predicated region
        $region103: #{gmm_forward.1} parent=101 // pred_check
          %p1252 = pneg %p241
        $region104: #{gmm_forward.1} parent=101 // pred_check_branch
          %1254 = sbr.rel (%p1252) target = $region106
        $region105: #{gmm_forward.1} parent=101 // pred_region
          %s1255 = sand.u32 %s226, 1
          %s1256 = scalar_lea.sflag [#allocation4], %s1255
          %s1257 = sand.u32 %s226, 1
          %s1258 = scalar_lea.vmem [#allocation3], %s1257
          %1259 = dma.done %s1256, 16
        $region106: #{gmm_forward.1} parent=101 // pred_fallthru
          _
      $region102: #{gmm_forward.1} parent=5 // pred_fallthru
        _
    $region6: #{gmm_forward.1} parent=1 // loop_footer
      %s22 = sadd.s32 1, %s18
    $region7: #{gmm_forward.1} parent=1 // loop_footer_branch
      %17 = sbr.rel target = $region3
    $region8: #{gmm_forward.1} parent=1 // loop_exit
      _
    %1260 = vsyncpa [#allocation4], 1
    %s1261 = scalar_lea.sflag [#allocation4], 1
    %1262 = vsyncpa %s1261, 1

</llo_original>
